<compile_context>
chip_gen: v5e
topology: v5e:2x2
jax: 0.10.0
libtpu: 0.0.40
codegen_flags: <defaults>
</compile_context>

<pallas_src>
import functools

import numpy as np
import jax
import jax.numpy as jnp
from jax.experimental import pallas as pl
from jax.experimental.pallas import tpu as pltpu

_PREC = jax.lax.Precision.HIGHEST  # used only by the pure-JAX reference


# --------------------------------------------------------------------------- #
# Pallas kernel.  grid = (B, N // TQ); one (TQ, C) query tile per step.
# --------------------------------------------------------------------------- #
def _nl_block_kernel(x_ref,                        # (N, C) f32, pool-friendly row order
                     wt_tpg_ref,                   # (C, 3*Ci) bf16: [theta | phi | g]^T fused
                     b_tpg_ref,                    # (1, 3*Ci) f32 fused bias
                     wt_w_ref,                     # (Ci, C)  bf16, BN folded
                     w_shift_ref,                  # (1, C)   f32, BN+bias folded
                     out_ref,                      # (TQ, C)  f32
                     theta_sc,                     # (N, Ci)      bf16 scratch
                     phi_sc,                       # (Ns_pad, Ci) bf16 scratch
                     g_sc,                         # (Ns_pad, Ci) bf16 scratch
                     *, tq, n_sub, ns_pad, ci):
    q = pl.program_id(1)

    # ---- q == 0: one fused MXU pass over the whole batch element ----------- #
    @pl.when(q == 0)
    def _():
        xk = x_ref[...].astype(jnp.bfloat16)                            # (N, C)
        # Single wide 1x1-conv matmul for theta|phi|g (3*Ci output lanes).
        a = jnp.dot(xk, wt_tpg_ref[...],
                    preferred_element_type=jnp.float32) + b_tpg_ref[...]  # (N, 3Ci) f32

        # theta: cache for every later query tile.
        theta_sc[...] = a[:, 0 * ci:1 * ci].astype(jnp.bfloat16)

        # MaxPool2d(2): rows are ordered [view00; view01; view10; view11],
        # so the pool is an elementwise max of 4 contiguous row blocks
        # (conv -> pool order, exactly as in the module).
        def pool4(v):
            return jnp.maximum(
                jnp.maximum(v[0 * n_sub:1 * n_sub], v[1 * n_sub:2 * n_sub]),
                jnp.maximum(v[2 * n_sub:3 * n_sub], v[3 * n_sub:4 * n_sub]))

        phi_p = pool4(a[:, 1 * ci:2 * ci])                              # (Ns, Ci) f32
        g_p = pool4(a[:, 2 * ci:3 * ci])                                # (Ns, Ci) f32

        if ns_pad == n_sub:
            phi_sc[...] = phi_p.astype(jnp.bfloat16)
            g_sc[...] = g_p.astype(jnp.bfloat16)
        else:
            # Pad key axis to a 128-lane multiple: zero the pad so the p @ g
            # matmul never touches uninitialized VMEM; padded logits are
            # masked to -inf below.
            phi_sc[...] = jnp.zeros(phi_sc.shape, phi_sc.dtype)
            g_sc[...] = jnp.zeros(g_sc.shape, g_sc.dtype)
            phi_sc[:n_sub, :] = phi_p.astype(jnp.bfloat16)
            g_sc[:n_sub, :] = g_p.astype(jnp.bfloat16)

    # ---- per-query-tile work ------------------------------------------------ #
    row0 = pl.multiple_of(q * tq, tq)
    x_q = x_ref[pl.ds(row0, tq), :]                                     # (TQ, C)  f32
    theta_q = theta_sc[pl.ds(row0, tq), :]                              # (TQ, Ci) bf16

    # f = theta @ phi^T (contraction on dim 1 of both; Mosaic feeds the MXU
    # with the transposed RHS), softmax in f32 on the VPU/EUP.
    f = jax.lax.dot_general(theta_q, phi_sc[...],
                            (((1,), (1,)), ((), ())),
                            preferred_element_type=jnp.float32)         # (TQ, Ns_pad)
    if ns_pad != n_sub:
        col = jax.lax.broadcasted_iota(jnp.int32, f.shape, 1)
        f = jnp.where(col < n_sub, f, -jnp.inf)
    f = f - jnp.max(f, axis=-1, keepdims=True)
    p = jnp.exp(f)
    p = p * pl.reciprocal(jnp.sum(p, axis=-1, keepdims=True), approx=True)

    y = jnp.dot(p.astype(jnp.bfloat16), g_sc[...],
                preferred_element_type=jnp.float32)                     # (TQ, Ci)

    # W (1x1 conv back to C) with eval-mode BatchNorm folded in, + residual.
    wy = jnp.dot(y.astype(jnp.bfloat16), wt_w_ref[...],
                 preferred_element_type=jnp.float32) + w_shift_ref[...]  # (TQ, C)
    out_ref[...] = wy + x_q


# --------------------------------------------------------------------------- #
# Host-side helpers (glue).
# --------------------------------------------------------------------------- #
def _upsample_matrix_1d(n):
    """1-D bilinear 2x upsampling matrix (2n, n), align_corners=False."""
    u = np.zeros((2 * n, n), dtype=np.float32)
    for i in range(2 * n):
        src = max((i + 0.5) * 0.5 - 0.5, 0.0)
        i0 = min(int(np.floor(src)), n - 1)
        lam = src - i0
        i1 = min(i0 + 1, n - 1)
        u[i, i0] += 1.0 - lam
        u[i, i1] += lam
    return u


def _pick_vmem_limit(n, c, ci, ns_pad, tq):
    """Generation-aware VMEM budget derived from the actual working set."""
    ws = (2 * n * c * 4                    # x block, double-buffered f32
          + 2 * tq * c * 4                 # (TQ, C) out tiles, double-buffered
          + n * ci * 2                     # theta scratch (bf16)
          + 2 * ns_pad * ci * 2            # phi + g scratch (bf16)
          + 2 * tq * ns_pad * 4            # f / p softmax temporaries (f32)
          + 2 * (3 * c * ci + ci * c) * 2  # weights, double-buffered bf16
          + 2 * (3 * ci + c) * 4)          # biases
    try:
        cap = int(pltpu.get_tpu_info().vmem_capacity_bytes)
    except Exception:
        cap = 64 * 1024 * 1024             # v7x per-core VMEM (most restrictive)
    limit = max(2 * ws + 8 * 1024 * 1024, 16 * 1024 * 1024)
    return int(min(limit, int(cap * 0.9)))


def init_params(key, in_channels, inter_channels=None):
    """Deterministic parameters matching NLBlockND.__init__ shapes (dim=2)."""
    if inter_channels is None:
        inter_channels = in_channels // 2
        if inter_channels == 0:
            inter_channels = 1
    c, ci = in_channels, inter_channels
    keys = jax.random.split(key, 8)

    def conv1x1(kw, kb, out_c, in_c):
        bound = 1.0 / float(np.sqrt(in_c))
        w = jax.random.uniform(kw, (out_c, in_c), jnp.float32, -bound, bound)
        b = jax.random.uniform(kb, (out_c,), jnp.float32, -bound, bound)
        return w, b

    w_g, b_g = conv1x1(keys[0], keys[1], ci, c)
    w_theta, b_theta = conv1x1(keys[2], keys[3], ci, c)
    w_phi, b_phi = conv1x1(keys[4], keys[5], ci, c)
    w_w, b_w = conv1x1(keys[6], keys[7], c, ci)

    return dict(
        w_g=w_g, b_g=b_g,
        w_theta=w_theta, b_theta=b_theta,
        w_phi=w_phi, b_phi=b_phi,
        w_w=w_w, b_w=b_w,
        # nn.init.constant_(self.W[1].weight, 0) / (..bias, 0)
        bn_gamma=jnp.zeros((c,), jnp.float32),
        bn_beta=jnp.zeros((c,), jnp.float32),
        bn_mean=jnp.zeros((c,), jnp.float32),
        bn_var=jnp.ones((c,), jnp.float32),
    )


@functools.partial(jax.jit, static_argnames=("tq",))
def nl_block_nd_forward(x, params, tq=256):
    """x: (B, C, H, W) NCHW  ->  (B, C, 2H, 2W) NCHW (matches the PyTorch module)."""
    B, C, H, W = x.shape
    Ci = params["w_theta"].shape[0]
    assert H % 2 == 0 and W % 2 == 0, "sub_sample MaxPool2d(2) path needs even H, W"
    Hp, Wp = H // 2, W // 2
    N, Ns = H * W, Hp * Wp
    tq = min(tq, N)
    assert N % tq == 0, "query tile must divide H*W"
    ns_pad = max(128, -(-Ns // 128) * 128)        # lane-dense key axis

    # NCHW -> channels-last rows in pool-friendly order:
    # [view(0,0); view(0,1); view(1,0); view(1,1)], each (Hp*Wp, C) row-major.
    # Pure layout glue -- same bytes as x, passed once.
    x_nhwc = jnp.transpose(x, (0, 2, 3, 1))                          # (B, H, W, C)
    x_perm = (x_nhwc.reshape(B, Hp, 2, Wp, 2, C)
              .transpose(0, 2, 4, 1, 3, 5)
              .reshape(B, N, C))

    bf16, f32 = jnp.bfloat16, jnp.float32
    # Fused [theta | phi | g] weight (C, 3*Ci) / bias (1, 3*Ci) for one wide
    # MXU pass per batch element; biases stay f32.
    wt_tpg = jnp.concatenate(
        [params["w_theta"].T, params["w_phi"].T, params["w_g"].T], axis=1).astype(bf16)
    b_tpg = jnp.concatenate(
        [params["b_theta"], params["b_phi"], params["b_g"]])[None, :].astype(f32)

    # Fold eval-mode BatchNorm + W-conv bias into one scaled weight + shift.
    eps = 1e-5
    bn_scale = params["bn_gamma"] / jnp.sqrt(params["bn_var"] + eps)
    bn_shift = params["bn_beta"] - params["bn_mean"] * bn_scale
    wt_w = (params["w_w"] * bn_scale[:, None]).T.astype(bf16)        # (Ci, C)
    w_shift = (params["b_w"] * bn_scale + bn_shift)[None, :].astype(f32)

    grid = (B, N // tq)
    const = lambda shape: pl.BlockSpec(shape, lambda b, q: (0, 0))

    out1_perm = pl.pallas_call(
        functools.partial(_nl_block_kernel, tq=tq, n_sub=Ns, ns_pad=ns_pad, ci=Ci),
        out_shape=jax.ShapeDtypeStruct((B, N, C), f32),
        grid_spec=pltpu.PrefetchScalarGridSpec(
            num_scalar_prefetch=0,
            grid=grid,
            in_specs=[
                # x: full per-batch block, block index invariant over q
                # -> DMA'd once per batch element, sliced per query tile in VMEM.
                pl.BlockSpec((None, N, C), lambda b, q: (b, 0, 0)),
                const((C, 3 * Ci)),                                  # fused theta/phi/g W^T
                const((1, 3 * Ci)),                                  # fused bias
                const((Ci, C)),                                      # BN-folded W conv
                const((1, C)),                                       # folded shift
            ],
            out_specs=pl.BlockSpec((None, tq, C), lambda b, q: (b, q, 0)),
            scratch_shapes=[pltpu.VMEM((N, Ci), bf16),               # theta cache
                            pltpu.VMEM((ns_pad, Ci), bf16),          # phi (padded keys)
                            pltpu.VMEM((ns_pad, Ci), bf16)],         # g   (padded keys)
        ),
        compiler_params=pltpu.CompilerParams(
            dimension_semantics=("parallel", "arbitrary"),
            vmem_limit_bytes=_pick_vmem_limit(N, C, Ci, ns_pad, tq),
        ),
    )(x_perm, wt_tpg, b_tpg, wt_w, w_shift)

    # Fused epilogue: un-permute + separable 2x bilinear upsample (align_corners
    # =False) + NHWC->NCHW as TWO einsums at default precision, reading
    # out1_perm directly (no un-permuted out1, no extra NHWC copy of the 4x
    # output is ever materialized).
    Uh = jnp.asarray(_upsample_matrix_1d(H))                         # (2H, H)
    Uw = jnp.asarray(_upsample_matrix_1d(W))                         # (2W, W)
    A = Uh.reshape(2 * H, Hp, 2).transpose(0, 2, 1)                  # A[u,dh,hp] = Uh[u,2hp+dh]
    Bm = Uw.reshape(2 * W, Wp, 2).transpose(0, 2, 1)                 # Bm[v,dw,wp] = Uw[v,2wp+dw]
    o6 = out1_perm.reshape(B, 2, 2, Hp, Wp, C)                       # (b, dh, dw, hp, wp, c)
    t = jnp.einsum('udh,bdehwc->buewc', A, o6)                       # (B, 2H, 2, Wp, C)
    out = jnp.einsum('vew,buewc->bcuv', Bm, t)                       # (B, C, 2H, 2W)
    return out


# --------------------------------------------------------------------------- #
# Pure-JAX f32 reference (mirrors the PyTorch forward) for validation.
# --------------------------------------------------------------------------- #
def nl_block_nd_reference(x, params):
    B, C, H, W = x.shape
    Ci = params["w_theta"].shape[0]

    def conv1x1(t, w, b):
        return (jnp.einsum('oi,bihw->bohw', w, t, precision=_PREC)
                + b[None, :, None, None])

    def maxpool2(t):
        Bc, Cc, Hc, Wc = t.shape
        return t.reshape(Bc, Cc, Hc // 2, 2, Wc // 2, 2).max(axis=(3, 5))

    g_x = maxpool2(conv1x1(x, params["w_g"], params["b_g"]))
    g_x = g_x.reshape(B, Ci, -1).transpose(0, 2, 1)                  # (B, Ns, Ci)
    theta_x = conv1x1(x, params["w_theta"], params["b_theta"])
    theta_x = theta_x.reshape(B, Ci, -1).transpose(0, 2, 1)          # (B, N, Ci)
    phi_x = maxpool2(conv1x1(x, params["w_phi"], params["b_phi"]))
    phi_x = phi_x.reshape(B, Ci, -1)                                 # (B, Ci, Ns)

    f = jnp.einsum('bnc,bcm->bnm', theta_x, phi_x, precision=_PREC)
    f = jax.nn.softmax(f, axis=-1)
    y = jnp.einsum('bnm,bmc->bnc', f, g_x, precision=_PREC)          # (B, N, Ci)
    y = y.transpose(0, 2, 1).reshape(B, Ci, H, W)

    W_y = conv1x1(y, params["w_w"], params["b_w"])
    eps = 1e-5
    scale = params["bn_gamma"] / jnp.sqrt(params["bn_var"] + eps)
    shift = params["bn_beta"] - params["bn_mean"] * scale
    W_y = W_y * scale[None, :, None, None] + shift[None, :, None, None]
    out1 = W_y + x

    up_h = jnp.asarray(_upsample_matrix_1d(H))
    up_w = jnp.asarray(_upsample_matrix_1d(W))
    o = jnp.einsum('uh,bchw->bcuw', up_h, out1, precision=_PREC)
    o = jnp.einsum('vw,bcuw->bcuv', up_w, o, precision=_PREC)
    return o


if __name__ == "__main__":
    # C = 128 keeps the (TQ, C) blocks lane-dense; NLBlockND(128) -> Ci = 64.
    B, C, H, W = 2, 128, 16, 16
    key = jax.random.PRNGKey(0)
    k_x, k_p = jax.random.split(key)
    x = jax.random.normal(k_x, (B, C, H, W), dtype=jnp.float32)
    params = init_params(k_p, C)

    # 1) module-faithful parameters (BN gamma = beta = 0 as in __init__),
    #    default query tile (single (N, C) tile per batch element).
    out = jax.block_until_ready(nl_block_nd_forward(x, params))
    assert out.shape == (B, C, 2 * H, 2 * W), out.shape
    assert bool(jnp.all(jnp.isfinite(out)))

    # 2) non-zero BN so the attention path actually contributes; use tq=64 so
    #    the theta/phi/g cache is reused across several query tiles (q > 0
    #    path exercised).  Kernel uses bf16 MXU operands + default-precision
    #    upsample, so the tolerance vs the f32 reference is loose but
    #    structural-bug-detecting.
    params_nz = dict(params)
    params_nz["bn_gamma"] = jnp.full((C,), 1.0, jnp.float32)
    params_nz["bn_beta"] = jnp.full((C,), 0.3, jnp.float32)
    params_nz["bn_mean"] = jnp.full((C,), 0.2, jnp.float32)
    params_nz["bn_var"] = jnp.full((C,), 1.0, jnp.float32)
    out_k = jax.block_until_ready(nl_block_nd_forward(x, params_nz, tq=64))
    out_r = jax.block_until_ready(nl_block_nd_reference(x, params_nz))
    diff = jnp.abs(out_k - out_r)
    max_err = float(jnp.max(diff))
    mean_err = float(jnp.mean(diff))
    assert max_err < 0.15, f"max abs err vs reference = {max_err}"
    assert mean_err < 0.03, f"mean abs err vs reference = {mean_err}"

    print("KERNEL_OK")
</pallas_src>

<mosaic_0001>
module attributes {stable_mosaic.version = 11 : i64} {
  func.func @_nl_block_kernel(%arg0: i32, %arg1: i32, %arg2: memref<1x256x128xf32, #tpu.memory_space<vmem>>, %arg3: memref<128x192xbf16, #tpu.memory_space<vmem>>, %arg4: memref<1x192xf32, #tpu.memory_space<vmem>>, %arg5: memref<64x128xbf16, #tpu.memory_space<vmem>>, %arg6: memref<1x128xf32, #tpu.memory_space<vmem>>, %arg7: memref<1x256x128xf32, #tpu.memory_space<vmem>>, %arg8: memref<256x64xbf16, #tpu.memory_space<vmem>>, %arg9: memref<128x64xbf16, #tpu.memory_space<vmem>>, %arg10: memref<128x64xbf16, #tpu.memory_space<vmem>>) attributes {dimension_semantics = [#tpu.dimension_semantics<parallel>, #tpu.dimension_semantics<arbitrary>], iteration_bounds = array<i64: 2, 1>, scalar_prefetch = 0 : i64, scratch_operands = 3 : i64, tpu.core_type = #tpu.core_type<tc>, window_params = [{transform_indices = @transform_0, window_bounds = array<i64: 1, 256, 128>}, {pipeline_mode = #tpu.pipeline_mode<synchronous>, transform_indices = @transform_1, window_bounds = array<i64: 128, 192>}, {pipeline_mode = #tpu.pipeline_mode<synchronous>, transform_indices = @transform_2, window_bounds = array<i64: 1, 192>}, {pipeline_mode = #tpu.pipeline_mode<synchronous>, transform_indices = @transform_3, window_bounds = array<i64: 64, 128>}, {pipeline_mode = #tpu.pipeline_mode<synchronous>, transform_indices = @transform_4, window_bounds = array<i64: 1, 128>}, {transform_indices = @transform_5, window_bounds = array<i64: 1, 256, 128>}]} {
    %c0_i32 = arith.constant 0 : i32
    %0 = arith.cmpi eq, %arg1, %c0_i32 : i32
    %1 = arith.extui %0 : i1 to i32
    %c0_i32_0 = arith.constant 0 : i32
    %2 = arith.cmpi ne, %1, %c0_i32_0 : i32
    scf.if %2 {
      %c0_19 = arith.constant 0 : index
      %c0_20 = arith.constant 0 : index
      %c0_21 = arith.constant 0 : index
      %40 = vector.load %arg2[%c0_19, %c0_20, %c0_21] : memref<1x256x128xf32, #tpu.memory_space<vmem>>, vector<1x256x128xf32>
      %41 = vector.shape_cast %40 : vector<1x256x128xf32> to vector<256x128xf32>
      %42 = arith.truncf %41 : vector<256x128xf32> to vector<256x128xbf16>
      %c0_22 = arith.constant 0 : index
      %c0_23 = arith.constant 0 : index
      %43 = vector.load %arg3[%c0_22, %c0_23] : memref<128x192xbf16, #tpu.memory_space<vmem>>, vector<128x192xbf16>
      %cst_24 = arith.constant dense<0.000000e+00> : vector<256x192xf32>
      %44 = tpu.matmul %42, %43, %cst_24 {dimension_numbers = #tpu.dot_dimension_numbers<[1], [0], [0], [1], [0, 0, 1, 1], [], []>} : vector<256x128xbf16>, vector<128x192xbf16>, vector<256x192xf32> -> vector<256x192xf32>
      %c0_25 = arith.constant 0 : index
      %c0_26 = arith.constant 0 : index
      %45 = vector.load %arg4[%c0_25, %c0_26] : memref<1x192xf32, #tpu.memory_space<vmem>>, vector<1x192xf32>
      %46 = vector.broadcast %45 : vector<1x192xf32> to vector<256x192xf32>
      %47 = arith.addf %44, %46 : vector<256x192xf32>
      %48 = vector.extract_strided_slice %47 {offsets = [0, 0], sizes = [256, 64], strides = [1, 1]} : vector<256x192xf32> to vector<256x64xf32>
      %49 = arith.truncf %48 : vector<256x64xf32> to vector<256x64xbf16>
      %c0_27 = arith.constant 0 : index
      %c0_28 = arith.constant 0 : index
      %50 = vector.load %arg8[%c0_27, %c0_28] : memref<256x64xbf16, #tpu.memory_space<vmem>>, vector<256x64xbf16>
      tpu.vector_store %arg8[%c0_27, %c0_28], %49 {strides = array<i32>} : memref<256x64xbf16, #tpu.memory_space<vmem>>, vector<256x64xbf16>,
      %51 = vector.extract_strided_slice %47 {offsets = [0, 64], sizes = [256, 64], strides = [1, 1]} : vector<256x192xf32> to vector<256x64xf32>
      %52 = vector.extract_strided_slice %51 {offsets = [0, 0], sizes = [64, 64], strides = [1, 1]} : vector<256x64xf32> to vector<64x64xf32>
      %53 = vector.extract_strided_slice %51 {offsets = [64, 0], sizes = [64, 64], strides = [1, 1]} : vector<256x64xf32> to vector<64x64xf32>
      %54 = arith.maximumf %52, %53 : vector<64x64xf32>
      %55 = vector.extract_strided_slice %51 {offsets = [128, 0], sizes = [64, 64], strides = [1, 1]} : vector<256x64xf32> to vector<64x64xf32>
      %56 = vector.extract_strided_slice %51 {offsets = [192, 0], sizes = [64, 64], strides = [1, 1]} : vector<256x64xf32> to vector<64x64xf32>
      %57 = arith.maximumf %55, %56 : vector<64x64xf32>
      %58 = arith.maximumf %54, %57 : vector<64x64xf32>
      %59 = vector.extract_strided_slice %47 {offsets = [0, 128], sizes = [256, 64], strides = [1, 1]} : vector<256x192xf32> to vector<256x64xf32>
      %60 = vector.extract_strided_slice %59 {offsets = [0, 0], sizes = [64, 64], strides = [1, 1]} : vector<256x64xf32> to vector<64x64xf32>
      %61 = vector.extract_strided_slice %59 {offsets = [64, 0], sizes = [64, 64], strides = [1, 1]} : vector<256x64xf32> to vector<64x64xf32>
      %62 = arith.maximumf %60, %61 : vector<64x64xf32>
      %63 = vector.extract_strided_slice %59 {offsets = [128, 0], sizes = [64, 64], strides = [1, 1]} : vector<256x64xf32> to vector<64x64xf32>
      %64 = vector.extract_strided_slice %59 {offsets = [192, 0], sizes = [64, 64], strides = [1, 1]} : vector<256x64xf32> to vector<64x64xf32>
      %65 = arith.maximumf %63, %64 : vector<64x64xf32>
      %66 = arith.maximumf %62, %65 : vector<64x64xf32>
      %cst_29 = arith.constant 0.000000e+00 : bf16
      %67 = vector.broadcast %cst_29 : bf16 to vector<128x64xbf16>
      %c0_30 = arith.constant 0 : index
      %c0_31 = arith.constant 0 : index
      %68 = vector.load %arg9[%c0_30, %c0_31] : memref<128x64xbf16, #tpu.memory_space<vmem>>, vector<128x64xbf16>
      tpu.vector_store %arg9[%c0_30, %c0_31], %67 {strides = array<i32>} : memref<128x64xbf16, #tpu.memory_space<vmem>>, vector<128x64xbf16>,
      %cst_32 = arith.constant 0.000000e+00 : bf16
      %69 = vector.broadcast %cst_32 : bf16 to vector<128x64xbf16>
      %c0_33 = arith.constant 0 : index
      %c0_34 = arith.constant 0 : index
      %70 = vector.load %arg10[%c0_33, %c0_34] : memref<128x64xbf16, #tpu.memory_space<vmem>>, vector<128x64xbf16>
      tpu.vector_store %arg10[%c0_33, %c0_34], %69 {strides = array<i32>} : memref<128x64xbf16, #tpu.memory_space<vmem>>, vector<128x64xbf16>,
      %71 = arith.truncf %58 : vector<64x64xf32> to vector<64x64xbf16>
      %c0_35 = arith.constant 0 : index
      %c0_36 = arith.constant 0 : index
      %72 = vector.load %arg9[%c0_35, %c0_36] : memref<128x64xbf16, #tpu.memory_space<vmem>>, vector<64x64xbf16>
      tpu.vector_store %arg9[%c0_35, %c0_36], %71 {strides = array<i32>} : memref<128x64xbf16, #tpu.memory_space<vmem>>, vector<64x64xbf16>,
      %73 = arith.truncf %66 : vector<64x64xf32> to vector<64x64xbf16>
      %c0_37 = arith.constant 0 : index
      %c0_38 = arith.constant 0 : index
      %74 = vector.load %arg10[%c0_37, %c0_38] : memref<128x64xbf16, #tpu.memory_space<vmem>>, vector<64x64xbf16>
      tpu.vector_store %arg10[%c0_37, %c0_38], %73 {strides = array<i32>} : memref<128x64xbf16, #tpu.memory_space<vmem>>, vector<64x64xbf16>,
    } else {
    }
    %c256_i32 = arith.constant 256 : i32
    %3 = arith.muli %arg1, %c256_i32 : i32
    %4 = tpu.assume_multiple %3, 256 : i32
    %c0 = arith.constant 0 : index
    %5 = arith.index_cast %4 : i32 to index
    %c0_1 = arith.constant 0 : index
    %6 = vector.load %arg2[%c0, %5, %c0_1] : memref<1x256x128xf32, #tpu.memory_space<vmem>>, vector<1x256x128xf32>
    %7 = vector.shape_cast %6 : vector<1x256x128xf32> to vector<256x128xf32>
    %8 = arith.index_cast %4 : i32 to index
    %c0_2 = arith.constant 0 : index
    %9 = vector.load %arg8[%8, %c0_2] : memref<256x64xbf16, #tpu.memory_space<vmem>>, vector<256x64xbf16>
    %c0_3 = arith.constant 0 : index
    %c0_4 = arith.constant 0 : index
    %10 = vector.load %arg9[%c0_3, %c0_4] : memref<128x64xbf16, #tpu.memory_space<vmem>>, vector<128x64xbf16>
    %cst = arith.constant dense<0.000000e+00> : vector<256x128xf32>
    %11 = tpu.matmul %9, %10, %cst {dimension_numbers = #tpu.dot_dimension_numbers<[1], [1], [0], [0], [0, 0, 1, 0], [], []>} : vector<256x64xbf16>, vector<128x64xbf16>, vector<256x128xf32> -> vector<256x128xf32>
    %12 = tpu.iota {dimensions = array<i32: 1>} : vector<256x128xi32>
    %c64_i32 = arith.constant 64 : i32
    %13 = vector.broadcast %c64_i32 : i32 to vector<256x128xi32>
    %14 = arith.cmpi slt, %12, %13 : vector<256x128xi32>
    %cst_5 = arith.constant 0xFF800000 : f32
    %15 = vector.broadcast %cst_5 : f32 to vector<256x128xf32>
    %16 = arith.select %14, %11, %15 : vector<256x128xi1>, vector<256x128xf32>
    %cst_6 = arith.constant dense<0xFF800000> : vector<256xf32>
    %17 = vector.multi_reduction <maximumf>, %16, %cst_6 [1] : vector<256x128xf32> to vector<256xf32>
    %18 = vector.shape_cast %17 : vector<256xf32> to vector<256x1xf32>
    %19 = vector.broadcast %18 : vector<256x1xf32> to vector<256x128xf32>
    %20 = arith.subf %16, %19 : vector<256x128xf32>
    %21 = math.exp %20 : vector<256x128xf32>
    %cst_7 = arith.constant dense<0.000000e+00> : vector<256xf32>
    %22 = vector.multi_reduction <add>, %21, %cst_7 [1] : vector<256x128xf32> to vector<256xf32>
    %23 = vector.shape_cast %22 : vector<256xf32> to vector<256x1xf32>
    %24 = tpu.reciprocal %23 {approx = true} : vector<256x1xf32> -> vector<256x1xf32>
    %25 = vector.broadcast %24 : vector<256x1xf32> to vector<256x128xf32>
    %26 = arith.mulf %21, %25 : vector<256x128xf32>
    %27 = arith.truncf %26 : vector<256x128xf32> to vector<256x128xbf16>
    %c0_8 = arith.constant 0 : index
    %c0_9 = arith.constant 0 : index
    %28 = vector.load %arg10[%c0_8, %c0_9] : memref<128x64xbf16, #tpu.memory_space<vmem>>, vector<128x64xbf16>
    %cst_10 = arith.constant dense<0.000000e+00> : vector<256x64xf32>
    %29 = tpu.matmul %27, %28, %cst_10 {dimension_numbers = #tpu.dot_dimension_numbers<[1], [0], [0], [1], [0, 0, 1, 1], [], []>} : vector<256x128xbf16>, vector<128x64xbf16>, vector<256x64xf32> -> vector<256x64xf32>
    %30 = arith.truncf %29 : vector<256x64xf32> to vector<256x64xbf16>
    %c0_11 = arith.constant 0 : index
    %c0_12 = arith.constant 0 : index
    %31 = vector.load %arg5[%c0_11, %c0_12] : memref<64x128xbf16, #tpu.memory_space<vmem>>, vector<64x128xbf16>
    %cst_13 = arith.constant dense<0.000000e+00> : vector<256x128xf32>
    %32 = tpu.matmul %30, %31, %cst_13 {dimension_numbers = #tpu.dot_dimension_numbers<[1], [0], [0], [1], [0, 0, 1, 1], [], []>} : vector<256x64xbf16>, vector<64x128xbf16>, vector<256x128xf32> -> vector<256x128xf32>
    %c0_14 = arith.constant 0 : index
    %c0_15 = arith.constant 0 : index
    %33 = vector.load %arg6[%c0_14, %c0_15] : memref<1x128xf32, #tpu.memory_space<vmem>>, vector<1x128xf32>
    %34 = vector.broadcast %33 : vector<1x128xf32> to vector<256x128xf32>
    %35 = arith.addf %32, %34 : vector<256x128xf32>
    %36 = arith.addf %35, %7 : vector<256x128xf32>
    %c0_16 = arith.constant 0 : index
    %c0_17 = arith.constant 0 : index
    %c0_18 = arith.constant 0 : index
    %37 = vector.load %arg7[%c0_16, %c0_17, %c0_18] : memref<1x256x128xf32, #tpu.memory_space<vmem>>, vector<1x256x128xf32>
    %38 = vector.shape_cast %37 : vector<1x256x128xf32> to vector<256x128xf32>
    %39 = vector.shape_cast %36 : vector<256x128xf32> to vector<1x256x128xf32>
    tpu.vector_store %arg7[%c0_16, %c0_17, %c0_18], %39 {strides = array<i32>} : memref<1x256x128xf32, #tpu.memory_space<vmem>>, vector<1x256x128xf32>,
    return
  }
  func.func @transform_0(%arg0: i32, %arg1: i32) -> (i32, i32, i32) {
    %c0_i32 = arith.constant 0 : i32
    %c0_i32_0 = arith.constant 0 : i32
    %c0_i32_1 = arith.constant 0 : i32
    return %arg0, %c0_i32, %c0_i32_0 : i32, i32, i32
  }
  func.func @transform_1(%arg0: i32, %arg1: i32) -> (i32, i32) {
    %c0_i32 = arith.constant 0 : i32
    %c0_i32_0 = arith.constant 0 : i32
    %c0_i32_1 = arith.constant 0 : i32
    return %c0_i32, %c0_i32_0 : i32, i32
  }
  func.func @transform_2(%arg0: i32, %arg1: i32) -> (i32, i32) {
    %c0_i32 = arith.constant 0 : i32
    %c0_i32_0 = arith.constant 0 : i32
    %c0_i32_1 = arith.constant 0 : i32
    return %c0_i32, %c0_i32_0 : i32, i32
  }
  func.func @transform_3(%arg0: i32, %arg1: i32) -> (i32, i32) {
    %c0_i32 = arith.constant 0 : i32
    %c0_i32_0 = arith.constant 0 : i32
    %c0_i32_1 = arith.constant 0 : i32
    return %c0_i32, %c0_i32_0 : i32, i32
  }
  func.func @transform_4(%arg0: i32, %arg1: i32) -> (i32, i32) {
    %c0_i32 = arith.constant 0 : i32
    %c0_i32_0 = arith.constant 0 : i32
    %c0_i32_1 = arith.constant 0 : i32
    return %c0_i32, %c0_i32_0 : i32, i32
  }
  func.func @transform_5(%arg0: i32, %arg1: i32) -> (i32, i32, i32) {
    %c0_i32 = arith.constant 0 : i32
    %c0_i32_0 = arith.constant 0 : i32
    return %arg0, %arg1, %c0_i32 : i32, i32, i32
  }
}

</mosaic_0001>

<llo_original>
// kernel: nl_block_nd_forward.1
$region0: #{nl_block_nd_forward.1}
  #allocation0 [shape = 'u32[]', space=smem, size = 0x4, offset = 0x4, fixed_abs, tag = 'smem constant byte address 0x4 - core index']
  #allocation1 [shape = 'u32[72,128]{1,0:T(1,128)}', space=vmem, size = 0x9000, scoped, tag = 'internal scratch']
  #allocation2 [shape = 'bf16[256,64]{1,0:T(8,128)(2,1)}', space=vmem, size = 0x10000, scoped, tag = 'scratch operand']
  #allocation3 [shape = 'bf16[128,64]{1,0:T(8,128)(2,1)}', space=vmem, size = 0x8000, scoped, tag = 'scratch operand']
  #allocation4 [shape = 'bf16[128,64]{1,0:T(8,128)(2,1)}', space=vmem, size = 0x8000, scoped, tag = 'scratch operand']
  %s0 = inlined_call_operand.vmem [shape: f32[2,256,128], index: 0, kind: input, shape index: {}]
  %s1 = inlined_call_operand.vmem [shape: bf16[128,192], index: 1, kind: input, shape index: {}]
  %s2 = inlined_call_operand.vmem [shape: f32[1,192], index: 2, kind: input, shape index: {}]
  %s3 = inlined_call_operand.vmem [shape: bf16[64,128], index: 3, kind: input, shape index: {}]
  %s4 = inlined_call_operand.vmem [shape: f32[1,128], index: 4, kind: input, shape index: {}]
  %s5 = inlined_call_operand.vmem [shape: f32[2,256,128], index: 5, kind: output, shape index: {}]
  %s6 = sld [smem:[#allocation0]]
  $region57: #{nl_block_nd_forward.1} parent=0
    _
  %s8 = ssub.s32 1, %s6
  %s9 = scalar_select 0, %s8, %s6
  loop: start=0, step=1, limit=4
  $region2: #{nl_block_nd_forward.1} parent=0 // loop_pre_header
    _
  $region3: #{nl_block_nd_forward.1} parent=0 // loop_header
    %s11 = sphi 0, %s15
    %p12 = scmp.ge.s32.totalorder %s11, 4
    %s18 = sphi 0, %s30
    %s19 = sphi 0, %s26
    %s20 = sphi 0, %s18
    %s21 = sphi 0, %s19
    %s22 = sphi 0, %s20
    %s23 = sphi 0, %s21
    %s33 = sphi 0, %s35
    %s36 = sphi 0, %s33
    %s37 = sphi 0, %s36
    %s53 = sphi 0, %s37
    %s57 = sphi 0, %s57
    %s59 = sphi 0, %s57
    %s60 = sphi 0, %s59
    %s74 = sphi 0, %s60
    %s78 = sphi 0, %s78
    %s80 = sphi 0, %s78
    %s81 = sphi 0, %s80
    %s95 = sphi 0, %s81
    %s99 = sphi 0, %s99
    %s101 = sphi 0, %s99
    %s102 = sphi 0, %s101
    %s116 = sphi 0, %s102
    %s120 = sphi 0, %s120
    %s122 = sphi 0, %s120
    %s123 = sphi 0, %s122
    %s137 = sphi 0, %s123
    %s145 = sphi 0, %s147
    %s148 = sphi 0, %s145
    %s149 = sphi 0, %s148
    %s165 = sphi 0, %s149
  $region4: #{nl_block_nd_forward.1} parent=0 // loop_header_branch
    %14 = sbr.rel (%p12) target = $region8
  $region5: #{nl_block_nd_forward.1} parent=0 // loop_body
    %s16 = ssub.s32 %s11, 1
    %s17 = ssub.s32 %s11, 2
    %s24 = sadd.s32 1, %s19
    %p25 = scmp.ge.s32.totalorder %s24, 1
    %s26 = scalar_select %p25, 0, %s24
    %s27 = sadd.s32 1, %s18
    %s28 = scalar_select %p25, %s27, %s18
    %p29 = scmp.ge.s32.totalorder %s28, 2
    %s30 = scalar_select %p29, 0, %s28
    %s31 = ssub.s32 %s18, %s30
    %p32 = scmp.eq.s32.totalorder %s31, 0
    %s34 = sadd.s32 %s33, 1
    %s35 = scalar_select %p32, %s33, %s34
    %p38 = pneg %p32
    %p39 = scmp.eq.s32.totalorder %s11, 1
    %p40 = por %p38, %p39
    %p41 = scmp.ne.s32.totalorder %s33, %s36
    %p42 = scmp.eq.s32.totalorder %s11, 0
    %p43 = por %p41, %p42
    %p44 = scmp.ne.s32.totalorder %s33, %s36
    %p45 = scmp.eq.s32.totalorder %s16, 1
    %p46 = por %p44, %p45
    %p47 = scmp.ne.s32.totalorder %s36, %s37
    %p48 = scmp.eq.s32.totalorder %s16, 0
    %p49 = por %p47, %p48
    %p50 = scmp.ne.s32.totalorder %s36, %s37
    %p51 = scmp.eq.s32.totalorder %s17, 1
    %p52 = por %p50, %p51
    %p54 = scmp.ne.s32.totalorder %s37, %s53
    %p55 = scmp.eq.s32.totalorder %s17, 0
    %p56 = por %p54, %p55
    %s58 = sadd.s32 %s57, 1
    %p61 = scmp.eq.s32.totalorder %s11, 1
    %p62 = scmp.ne.s32.totalorder %s57, %s59
    %p63 = scmp.eq.s32.totalorder %s11, 0
    %p64 = por %p62, %p63
    %p65 = scmp.ne.s32.totalorder %s57, %s59
    %p66 = scmp.eq.s32.totalorder %s16, 1
    %p67 = por %p65, %p66
    %p68 = scmp.ne.s32.totalorder %s59, %s60
    %p69 = scmp.eq.s32.totalorder %s16, 0
    %p70 = por %p68, %p69
    %p71 = scmp.ne.s32.totalorder %s59, %s60
    %p72 = scmp.eq.s32.totalorder %s17, 1
    %p73 = por %p71, %p72
    %p75 = scmp.ne.s32.totalorder %s60, %s74
    %p76 = scmp.eq.s32.totalorder %s17, 0
    %p77 = por %p75, %p76
    %s79 = sadd.s32 %s78, 1
    %p82 = scmp.eq.s32.totalorder %s11, 1
    %p83 = scmp.ne.s32.totalorder %s78, %s80
    %p84 = scmp.eq.s32.totalorder %s11, 0
    %p85 = por %p83, %p84
    %p86 = scmp.ne.s32.totalorder %s78, %s80
    %p87 = scmp.eq.s32.totalorder %s16, 1
    %p88 = por %p86, %p87
    %p89 = scmp.ne.s32.totalorder %s80, %s81
    %p90 = scmp.eq.s32.totalorder %s16, 0
    %p91 = por %p89, %p90
    %p92 = scmp.ne.s32.totalorder %s80, %s81
    %p93 = scmp.eq.s32.totalorder %s17, 1
    %p94 = por %p92, %p93
    %p96 = scmp.ne.s32.totalorder %s81, %s95
    %p97 = scmp.eq.s32.totalorder %s17, 0
    %p98 = por %p96, %p97
    %s100 = sadd.s32 %s99, 1
    %p103 = scmp.eq.s32.totalorder %s11, 1
    %p104 = scmp.ne.s32.totalorder %s99, %s101
    %p105 = scmp.eq.s32.totalorder %s11, 0
    %p106 = por %p104, %p105
    %p107 = scmp.ne.s32.totalorder %s99, %s101
    %p108 = scmp.eq.s32.totalorder %s16, 1
    %p109 = por %p107, %p108
    %p110 = scmp.ne.s32.totalorder %s101, %s102
    %p111 = scmp.eq.s32.totalorder %s16, 0
    %p112 = por %p110, %p111
    %p113 = scmp.ne.s32.totalorder %s101, %s102
    %p114 = scmp.eq.s32.totalorder %s17, 1
    %p115 = por %p113, %p114
    %p117 = scmp.ne.s32.totalorder %s102, %s116
    %p118 = scmp.eq.s32.totalorder %s17, 0
    %p119 = por %p117, %p118
    %s121 = sadd.s32 %s120, 1
    %p124 = scmp.eq.s32.totalorder %s11, 1
    %p125 = scmp.ne.s32.totalorder %s120, %s122
    %p126 = scmp.eq.s32.totalorder %s11, 0
    %p127 = por %p125, %p126
    %p128 = scmp.ne.s32.totalorder %s120, %s122
    %p129 = scmp.eq.s32.totalorder %s16, 1
    %p130 = por %p128, %p129
    %p131 = scmp.ne.s32.totalorder %s122, %s123
    %p132 = scmp.eq.s32.totalorder %s16, 0
    %p133 = por %p131, %p132
    %p134 = scmp.ne.s32.totalorder %s122, %s123
    %p135 = scmp.eq.s32.totalorder %s17, 1
    %p136 = por %p134, %p135
    %p138 = scmp.ne.s32.totalorder %s123, %s137
    %p139 = scmp.eq.s32.totalorder %s17, 0
    %p140 = por %p138, %p139
    %s141 = ssub.s32 %s18, %s30
    %s142 = ssub.s32 %s19, %s26
    %s143 = sor.u32 %s141, %s142
    %p144 = scmp.eq.s32.totalorder %s143, 0
    %s146 = sadd.s32 %s145, 1
    %s147 = scalar_select %p144, %s145, %s146
    %p150 = pneg %p144
    %p151 = scmp.eq.s32.totalorder %s11, 1
    %p152 = por %p150, %p151
    %p153 = scmp.ne.s32.totalorder %s145, %s148
    %p154 = scmp.eq.s32.totalorder %s11, 0
    %p155 = por %p153, %p154
    %p156 = scmp.ne.s32.totalorder %s145, %s148
    %p157 = scmp.eq.s32.totalorder %s16, 1
    %p158 = por %p156, %p157
    %p159 = scmp.ne.s32.totalorder %s148, %s149
    %p160 = scmp.eq.s32.totalorder %s16, 0
    %p161 = por %p159, %p160
    %p162 = scmp.ne.s32.totalorder %s148, %s149
    %p163 = scmp.eq.s32.totalorder %s17, 1
    %p164 = por %p162, %p163
    %p166 = scmp.ne.s32.totalorder %s149, %s165
    %p167 = scmp.eq.s32.totalorder %s17, 0
    %p168 = por %p166, %p167
    %p169 = scmp.le.s32.totalorder 1, %s11
    %p170 = scmp.lt.s32.totalorder %s11, 3
    %p171 = pnand %p169, %p170
    %p172 = pneg %p171
    // Predicated region
    $region9: #{nl_block_nd_forward.1} parent=5 // pred_check
      _
    $region10: #{nl_block_nd_forward.1} parent=5 // pred_check_branch
      %174 = sbr.rel (%p171) target = $region12
    $region11: #{nl_block_nd_forward.1} parent=5 // pred_region
      %s175 = ssub.s32 %s11, 1
      // Predicated region
      $region13: #{nl_block_nd_forward.1} parent=11 // pred_check
        %p176 = pneg %p70
      $region14: #{nl_block_nd_forward.1} parent=11 // pred_check_branch
        %178 = sbr.rel (%p176) target = $region16
      $region15: #{nl_block_nd_forward.1} parent=11 // pred_region
        _
      $region16: #{nl_block_nd_forward.1} parent=11 // pred_fallthru
        _
      // Predicated region
      $region17: #{nl_block_nd_forward.1} parent=11 // pred_check
        %p179 = pneg %p91
      $region18: #{nl_block_nd_forward.1} parent=11 // pred_check_branch
        %181 = sbr.rel (%p179) target = $region20
      $region19: #{nl_block_nd_forward.1} parent=11 // pred_region
        _
      $region20: #{nl_block_nd_forward.1} parent=11 // pred_fallthru
        _
      // Predicated region
      $region21: #{nl_block_nd_forward.1} parent=11 // pred_check
        %p182 = pneg %p112
      $region22: #{nl_block_nd_forward.1} parent=11 // pred_check_branch
        %184 = sbr.rel (%p182) target = $region24
      $region23: #{nl_block_nd_forward.1} parent=11 // pred_region
        _
      $region24: #{nl_block_nd_forward.1} parent=11 // pred_fallthru
        _
      // Predicated region
      $region25: #{nl_block_nd_forward.1} parent=11 // pred_check
        %p185 = pneg %p133
      $region26: #{nl_block_nd_forward.1} parent=11 // pred_check_branch
        %187 = sbr.rel (%p185) target = $region28
      $region27: #{nl_block_nd_forward.1} parent=11 // pred_region
        _
      $region28: #{nl_block_nd_forward.1} parent=11 // pred_fallthru
        _
    $region12: #{nl_block_nd_forward.1} parent=5 // pred_fallthru
      _
    %p188 = scmp.lt.s32.totalorder %s11, 2
    // Predicated region
    $region29: #{nl_block_nd_forward.1} parent=5 // pred_check
      %p189 = pneg %p188
    $region30: #{nl_block_nd_forward.1} parent=5 // pred_check_branch
      %191 = sbr.rel (%p189) target = $region32
    $region31: #{nl_block_nd_forward.1} parent=5 // pred_region
      // Predicated region
      $region33: #{nl_block_nd_forward.1} parent=31 // pred_check
        %p192 = pneg %p43
      $region34: #{nl_block_nd_forward.1} parent=31 // pred_check_branch
        %194 = sbr.rel (%p192) target = $region36
      $region35: #{nl_block_nd_forward.1} parent=31 // pred_region
        %p195 = scmp.lt.s32.totalorder %s18, 1
        %s196 = scalar_select %p195, %s18, 1
        %s197 = smul.addr %s196, 32
        %s198 = smul.addr %s197, 8
        %s199 = scalar_lea.vmem %s0, %s198
      $region36: #{nl_block_nd_forward.1} parent=31 // pred_fallthru
        _
    $region32: #{nl_block_nd_forward.1} parent=5 // pred_fallthru
      _
    %p200 = scmp.le.s32.totalorder 1, %s11
    %p201 = scmp.lt.s32.totalorder %s11, 3
    %p202 = pnand %p200, %p201
    %p203 = pneg %p202
    // Predicated region
    $region37: #{nl_block_nd_forward.1} parent=5 // pred_check
      _
    $region38: #{nl_block_nd_forward.1} parent=5 // pred_check_branch
      %205 = sbr.rel (%p202) target = $region40
    $region39: #{nl_block_nd_forward.1} parent=5 // pred_region
      %s206 = ssub.s32 %s11, 1
      %p207 = scmp.lt.s32.totalorder %s20, 1
      %s208 = scalar_select %p207, %s20, 1
      %s209 = smul.addr %s208, 32
      %s210 = smul.addr %s209, 8
      %s211 = scalar_lea.vmem %s0, %s210
      %p212 = pneg %p49
      %p213 = pneg %p46
      %p214 = pneg %p70
      %p215 = pneg %p67
      %p216 = pneg %p91
      %p217 = pneg %p88
      %p218 = pneg %p112
      %p219 = pneg %p109
      %p220 = pneg %p133
      %p221 = pneg %p130
      %p222 = pneg %p161
      %p223 = pneg %p158
      %s224 = smul.u32 32, %s21
      %p225 = scmp.lt.s32.totalorder %s20, 1
      %s226 = scalar_select %p225, %s20, 1
      %p227 = scmp.lt.s32.totalorder %s224, 31
      %s228 = scalar_select %p227, %s224, 31
      %s229 = smul.addr %s226, 32
      %s230 = sadd.s32 %s228, %s229
      %s231 = smul.addr %s230, 8
      %s232 = scalar_lea.vmem %s5, %s231
      %p233 = scmp.lt.s32.totalorder %s20, 1
      %s234 = scalar_select %p233, %s20, 1
      %s235 = smul.addr %s234, 32
      %s236 = smul.addr %s235, 8
      %s237 = scalar_lea.vmem %s0, %s236
      %s238 = smul.u32 32, %s21
      %p239 = scmp.lt.s32.totalorder %s20, 1
      %s240 = scalar_select %p239, %s20, 1
      %p241 = scmp.lt.s32.totalorder %s238, 31
      %s242 = scalar_select %p241, %s238, 31
      %s243 = smul.addr %s240, 32
      %s244 = sadd.s32 %s242, %s243
      %s245 = smul.addr %s244, 8
      %s246 = scalar_lea.vmem %s5, %s245
      %s247 = smul.u32 32, %s21
      %p249 = scmp.eq.s32.totalorder %s21, 0
      // Predicated region
      $region41: #{nl_block_nd_forward.1} parent=39 // pred_check
        %p250 = pneg %p249
      $region42: #{nl_block_nd_forward.1} parent=39 // pred_check_branch
        %252 = sbr.rel (%p250) target = $region44
      $region43: #{nl_block_nd_forward.1} parent=39 // pred_region
        %v253 = vld [vmem:[%s237] sm:$0xff]
        %v254 = vld [vmem:[%s237 + $0x8] sm:$0xff]
        %v255 = vld [vmem:[%s237 + $0x10] sm:$0xff]
        %v256 = vld [vmem:[%s237 + $0x18] sm:$0xff]
        %v257 = vld [vmem:[%s237 + $0x20] sm:$0xff]
        %v258 = vld [vmem:[%s237 + $0x28] sm:$0xff]
        %v259 = vld [vmem:[%s237 + $0x30] sm:$0xff]
        %v260 = vld [vmem:[%s237 + $0x38] sm:$0xff]
        %v261 = vld [vmem:[%s237 + $0x40] sm:$0xff]
        %v262 = vld [vmem:[%s237 + $0x48] sm:$0xff]
        %v263 = vld [vmem:[%s237 + $0x50] sm:$0xff]
        %v264 = vld [vmem:[%s237 + $0x58] sm:$0xff]
        %v265 = vld [vmem:[%s237 + $0x60] sm:$0xff]
        %v266 = vld [vmem:[%s237 + $0x68] sm:$0xff]
        %v267 = vld [vmem:[%s237 + $0x70] sm:$0xff]
        %v268 = vld [vmem:[%s237 + $0x78] sm:$0xff]
        %v269 = vld [vmem:[%s237 + $0x80] sm:$0xff]
        %v270 = vld [vmem:[%s237 + $0x88] sm:$0xff]
        %v271 = vld [vmem:[%s237 + $0x90] sm:$0xff]
        %v272 = vld [vmem:[%s237 + $0x98] sm:$0xff]
        %v273 = vld [vmem:[%s237 + $0xa0] sm:$0xff]
        %v274 = vld [vmem:[%s237 + $0xa8] sm:$0xff]
        %v275 = vld [vmem:[%s237 + $0xb0] sm:$0xff]
        %v276 = vld [vmem:[%s237 + $0xb8] sm:$0xff]
        %v277 = vld [vmem:[%s237 + $0xc0] sm:$0xff]
        %v278 = vld [vmem:[%s237 + $0xc8] sm:$0xff]
        %v279 = vld [vmem:[%s237 + $0xd0] sm:$0xff]
        %v280 = vld [vmem:[%s237 + $0xd8] sm:$0xff]
        %v281 = vld [vmem:[%s237 + $0xe0] sm:$0xff]
        %v282 = vld [vmem:[%s237 + $0xe8] sm:$0xff]
        %v283 = vld [vmem:[%s237 + $0xf0] sm:$0xff]
        %v284 = vld [vmem:[%s237 + $0xf8] sm:$0xff]
        %v285 = vpack.c.bf16 %v254, %v253
        %v286 = vpack.c.bf16 %v256, %v255
        %v287 = vpack.c.bf16 %v258, %v257
        %v288 = vpack.c.bf16 %v260, %v259
        %v289 = vpack.c.bf16 %v262, %v261
        %v290 = vpack.c.bf16 %v264, %v263
        %v291 = vpack.c.bf16 %v266, %v265
        %v292 = vpack.c.bf16 %v268, %v267
        %v293 = vpack.c.bf16 %v270, %v269
        %v294 = vpack.c.bf16 %v272, %v271
        %v295 = vpack.c.bf16 %v274, %v273
        %v296 = vpack.c.bf16 %v276, %v275
        %v297 = vpack.c.bf16 %v278, %v277
        %v298 = vpack.c.bf16 %v280, %v279
        %v299 = vpack.c.bf16 %v282, %v281
        %v300 = vpack.c.bf16 %v284, %v283
        %v301 = vld [vmem:[%s1] sm:$0xff]
        %v302 = vld [vmem:[%s1 + $0x8] sm:$0xff]
        %v303 = vld [vmem:[%s1 + $0x10] sm:$0xff]
        %v304 = vld [vmem:[%s1 + $0x18] sm:$0xff]
        %v305 = vld [vmem:[%s1 + $0x20] sm:$0xff]
        %v306 = vld [vmem:[%s1 + $0x28] sm:$0xff]
        %v307 = vld [vmem:[%s1 + $0x30] sm:$0xff]
        %v308 = vld [vmem:[%s1 + $0x38] sm:$0xff]
        %v309 = vld [vmem:[%s1 + $0x40] sm:$0xff]
        %v310 = vld [vmem:[%s1 + $0x48] sm:$0xff]
        %v311 = vld [vmem:[%s1 + $0x50] sm:$0xff]
        %v312 = vld [vmem:[%s1 + $0x58] sm:$0xff]
        %v313 = vld [vmem:[%s1 + $0x60] sm:$0xff]
        %v314 = vld [vmem:[%s1 + $0x68] sm:$0xff]
        %v315 = vld [vmem:[%s1 + $0x70] sm:$0xff]
        %v316 = vld [vmem:[%s1 + $0x78] sm:$0xff]
        %v317 = vld [vmem:[%s2] sm:$0x3]
        %v319 = vperm.slane %v317, 0
        %v320 = vperm.slane %v317, 1
        %v339 = vunpack.c.l.b16 %v301
        %v340 = vunpack.c.h.b16 %v301
        %v341 = vunpack.c.l.b16 %v302
        %v342 = vunpack.c.h.b16 %v302
        %v343 = vunpack.c.l.b16 %v303
        %v344 = vunpack.c.h.b16 %v303
        %v345 = vunpack.c.l.b16 %v304
        %v346 = vunpack.c.h.b16 %v304
        %v347 = vunpack.c.l.b16 %v305
        %v348 = vunpack.c.h.b16 %v305
        %v349 = vunpack.c.l.b16 %v306
        %v350 = vunpack.c.h.b16 %v306
        %v351 = vunpack.c.l.b16 %v307
        %v352 = vunpack.c.h.b16 %v307
        %v353 = vunpack.c.l.b16 %v308
        %v354 = vunpack.c.h.b16 %v308
        %v355 = vunpack.c.l.b16 %v309
        %v356 = vunpack.c.h.b16 %v309
        %v357 = vunpack.c.l.b16 %v310
        %v358 = vunpack.c.h.b16 %v310
        %v359 = vunpack.c.l.b16 %v311
        %v360 = vunpack.c.h.b16 %v311
        %v361 = vunpack.c.l.b16 %v312
        %v362 = vunpack.c.h.b16 %v312
        %v363 = vunpack.c.l.b16 %v313
        %v364 = vunpack.c.h.b16 %v313
        %v365 = vunpack.c.l.b16 %v314
        %v366 = vunpack.c.h.b16 %v314
        %v367 = vunpack.c.l.b16 %v315
        %v368 = vunpack.c.h.b16 %v315
        %v369 = vunpack.c.l.b16 %v316
        %v370 = vunpack.c.h.b16 %v316
        %v371 = vpack.c.b16 %v341, %v339
        %v372 = vpack.c.b16 %v342, %v340
        %v373 = vpack.c.b16 %v345, %v343
        %v374 = vpack.c.b16 %v346, %v344
        %v375 = vpack.c.b16 %v349, %v347
        %v376 = vpack.c.b16 %v350, %v348
        %v377 = vpack.c.b16 %v353, %v351
        %v378 = vpack.c.b16 %v354, %v352
        %v379 = vpack.c.b16 %v357, %v355
        %v380 = vpack.c.b16 %v358, %v356
        %v381 = vpack.c.b16 %v361, %v359
        %v382 = vpack.c.b16 %v362, %v360
        %v383 = vpack.c.b16 %v365, %v363
        %v384 = vpack.c.b16 %v366, %v364
        %v385 = vpack.c.b16 %v369, %v367
        %v386 = vpack.c.b16 %v370, %v368
        %403 = vmatpush.bf16.msra.mxu0 %v385
        %404 = vmatpush.bf16.msra.mxu0 %v383
        %405 = vmatpush.bf16.msra.mxu0 %v381
        %406 = vmatpush.bf16.msra.mxu0 %v379
        %407 = vmatpush.bf16.msra.mxu0 %v377
        %408 = vmatpush.bf16.msra.mxu0 %v375
        %409 = vmatpush.bf16.msra.mxu0 %v373
        %410 = vmatpush.bf16.msra.mxu0 %v371
        %411 = vmatmul.bf16.gmra.mxu0 %v285
        %v412 = vpop.f32.mrf.mxu0
        %v413 = vadd.f32 %v319, %v412
        %v414 = vpop.f32.mrf.mxu0
        %v415 = vadd.f32 %v319, %v414
        %416 = vmatmul.bf16.gmra.mxu0 %v286
        %v417 = vpop.f32.mrf.mxu0
        %v418 = vadd.f32 %v319, %v417
        %v419 = vpop.f32.mrf.mxu0
        %v420 = vadd.f32 %v319, %v419
        %421 = vmatmul.bf16.gmra.mxu0 %v287
        %v422 = vpop.f32.mrf.mxu0
        %v423 = vadd.f32 %v319, %v422
        %v424 = vpop.f32.mrf.mxu0
        %v425 = vadd.f32 %v319, %v424
        %426 = vmatmul.bf16.gmra.mxu0 %v288
        %v427 = vpop.f32.mrf.mxu0
        %v428 = vadd.f32 %v319, %v427
        %v429 = vpop.f32.mrf.mxu0
        %v430 = vadd.f32 %v319, %v429
        %431 = vmatmul.bf16.gmra.mxu0 %v289
        %v432 = vpop.f32.mrf.mxu0
        %v433 = vadd.f32 %v319, %v432
        %v434 = vpop.f32.mrf.mxu0
        %v435 = vadd.f32 %v319, %v434
        %436 = vmatmul.bf16.gmra.mxu0 %v290
        %v437 = vpop.f32.mrf.mxu0
        %v438 = vadd.f32 %v319, %v437
        %v439 = vpop.f32.mrf.mxu0
        %v440 = vadd.f32 %v319, %v439
        %441 = vmatmul.bf16.gmra.mxu0 %v291
        %v442 = vpop.f32.mrf.mxu0
        %v443 = vadd.f32 %v319, %v442
        %v444 = vpop.f32.mrf.mxu0
        %v445 = vadd.f32 %v319, %v444
        %446 = vmatmul.bf16.gmra.mxu0 %v292
        %v447 = vpop.f32.mrf.mxu0
        %v448 = vadd.f32 %v319, %v447
        %v449 = vpop.f32.mrf.mxu0
        %v450 = vadd.f32 %v319, %v449
        %451 = vmatmul.bf16.gmra.mxu0 %v293
        %v452 = vpop.f32.mrf.mxu0
        %v453 = vadd.f32 %v319, %v452
        %v454 = vpop.f32.mrf.mxu0
        %v455 = vadd.f32 %v319, %v454
        %456 = vmatmul.bf16.gmra.mxu0 %v294
        %v457 = vpop.f32.mrf.mxu0
        %v458 = vadd.f32 %v319, %v457
        %v459 = vpop.f32.mrf.mxu0
        %v460 = vadd.f32 %v319, %v459
        %461 = vmatmul.bf16.gmra.mxu0 %v295
        %v462 = vpop.f32.mrf.mxu0
        %v463 = vadd.f32 %v319, %v462
        %v464 = vpop.f32.mrf.mxu0
        %v465 = vadd.f32 %v319, %v464
        %466 = vmatmul.bf16.gmra.mxu0 %v296
        %v467 = vpop.f32.mrf.mxu0
        %v468 = vadd.f32 %v319, %v467
        %v469 = vpop.f32.mrf.mxu0
        %v470 = vadd.f32 %v319, %v469
        %471 = vmatmul.bf16.gmra.mxu0 %v297
        %v472 = vpop.f32.mrf.mxu0
        %v473 = vadd.f32 %v319, %v472
        %v474 = vpop.f32.mrf.mxu0
        %v475 = vadd.f32 %v319, %v474
        %476 = vmatmul.bf16.gmra.mxu0 %v298
        %v477 = vpop.f32.mrf.mxu0
        %v478 = vadd.f32 %v319, %v477
        %v479 = vpop.f32.mrf.mxu0
        %v480 = vadd.f32 %v319, %v479
        %481 = vmatmul.bf16.gmra.mxu0 %v299
        %v482 = vpop.f32.mrf.mxu0
        %v483 = vadd.f32 %v319, %v482
        %v484 = vpop.f32.mrf.mxu0
        %v485 = vadd.f32 %v319, %v484
        %486 = vmatmul.bf16.gmra.mxu0 %v300
        %v487 = vpop.f32.mrf.mxu0
        %v488 = vadd.f32 %v319, %v487
        %v489 = vpop.f32.mrf.mxu0
        %v490 = vadd.f32 %v319, %v489
        %491 = vdwg.mxu0
        %492 = vmatpush.bf16.msra.mxu0 %v386
        %493 = vmatpush.bf16.msra.mxu0 %v384
        %494 = vmatpush.bf16.msra.mxu0 %v382
        %495 = vmatpush.bf16.msra.mxu0 %v380
        %496 = vmatpush.bf16.msra.mxu0 %v378
        %497 = vmatpush.bf16.msra.mxu0 %v376
        %498 = vmatpush.bf16.msra.mxu0 %v374
        %499 = vmatpush.bf16.msra.mxu0 %v372
        %500 = vmatmul.bf16.gmra.mxu0 %v285
        %v501 = vpop.f32.mrf.mxu0
        %v502 = vadd.f32 %v320, %v501
        %v503 = vpop.f32.mrf.mxu0
        %v504 = vadd.f32 %v320, %v503
        %505 = vmatmul.bf16.gmra.mxu0 %v286
        %v506 = vpop.f32.mrf.mxu0
        %v507 = vadd.f32 %v320, %v506
        %v508 = vpop.f32.mrf.mxu0
        %v509 = vadd.f32 %v320, %v508
        %510 = vmatmul.bf16.gmra.mxu0 %v287
        %v511 = vpop.f32.mrf.mxu0
        %v512 = vadd.f32 %v320, %v511
        %v513 = vpop.f32.mrf.mxu0
        %v514 = vadd.f32 %v320, %v513
        %515 = vmatmul.bf16.gmra.mxu0 %v288
        %v516 = vpop.f32.mrf.mxu0
        %v517 = vadd.f32 %v320, %v516
        %v518 = vpop.f32.mrf.mxu0
        %v519 = vadd.f32 %v320, %v518
        %520 = vmatmul.bf16.gmra.mxu0 %v289
        %v521 = vpop.f32.mrf.mxu0
        %v522 = vadd.f32 %v320, %v521
        %v523 = vpop.f32.mrf.mxu0
        %v524 = vadd.f32 %v320, %v523
        %525 = vmatmul.bf16.gmra.mxu0 %v290
        %v526 = vpop.f32.mrf.mxu0
        %v527 = vadd.f32 %v320, %v526
        %v528 = vpop.f32.mrf.mxu0
        %v529 = vadd.f32 %v320, %v528
        %530 = vmatmul.bf16.gmra.mxu0 %v291
        %v531 = vpop.f32.mrf.mxu0
        %v532 = vadd.f32 %v320, %v531
        %v533 = vpop.f32.mrf.mxu0
        %v534 = vadd.f32 %v320, %v533
        %535 = vmatmul.bf16.gmra.mxu0 %v292
        %v536 = vpop.f32.mrf.mxu0
        %v537 = vadd.f32 %v320, %v536
        %v538 = vpop.f32.mrf.mxu0
        %v539 = vadd.f32 %v320, %v538
        %540 = vmatmul.bf16.gmra.mxu0 %v293
        %v541 = vpop.f32.mrf.mxu0
        %v542 = vadd.f32 %v320, %v541
        %v543 = vpop.f32.mrf.mxu0
        %v544 = vadd.f32 %v320, %v543
        %545 = vmatmul.bf16.gmra.mxu0 %v294
        %v546 = vpop.f32.mrf.mxu0
        %v547 = vadd.f32 %v320, %v546
        %v548 = vpop.f32.mrf.mxu0
        %v549 = vadd.f32 %v320, %v548
        %550 = vmatmul.bf16.gmra.mxu0 %v295
        %v551 = vpop.f32.mrf.mxu0
        %v552 = vadd.f32 %v320, %v551
        %v553 = vpop.f32.mrf.mxu0
        %v554 = vadd.f32 %v320, %v553
        %555 = vmatmul.bf16.gmra.mxu0 %v296
        %v556 = vpop.f32.mrf.mxu0
        %v557 = vadd.f32 %v320, %v556
        %v558 = vpop.f32.mrf.mxu0
        %v559 = vadd.f32 %v320, %v558
        %560 = vmatmul.bf16.gmra.mxu0 %v297
        %v561 = vpop.f32.mrf.mxu0
        %v562 = vadd.f32 %v320, %v561
        %v563 = vpop.f32.mrf.mxu0
        %v564 = vadd.f32 %v320, %v563
        %565 = vmatmul.bf16.gmra.mxu0 %v298
        %v566 = vpop.f32.mrf.mxu0
        %v567 = vadd.f32 %v320, %v566
        %v568 = vpop.f32.mrf.mxu0
        %v569 = vadd.f32 %v320, %v568
        %570 = vmatmul.bf16.gmra.mxu0 %v299
        %v571 = vpop.f32.mrf.mxu0
        %v572 = vadd.f32 %v320, %v571
        %v573 = vpop.f32.mrf.mxu0
        %v574 = vadd.f32 %v320, %v573
        %575 = vmatmul.bf16.gmra.mxu0 %v300
        %v576 = vpop.f32.mrf.mxu0
        %v577 = vadd.f32 %v320, %v576
        %v578 = vpop.f32.mrf.mxu0
        %v579 = vadd.f32 %v320, %v578
        %580 = vdwg.mxu0
        %v581 = vpack.c.bf16 %v413, %v413
        %v582 = vpack.c.bf16 %v415, %v415
        %v583 = vpack.c.bf16 %v418, %v418
        %v584 = vpack.c.bf16 %v420, %v420
        %v585 = vpack.c.bf16 %v423, %v423
        %v586 = vpack.c.bf16 %v425, %v425
        %v587 = vpack.c.bf16 %v428, %v428
        %v588 = vpack.c.bf16 %v430, %v430
        %v589 = vpack.c.bf16 %v433, %v433
        %v590 = vpack.c.bf16 %v435, %v435
        %v591 = vpack.c.bf16 %v438, %v438
        %v592 = vpack.c.bf16 %v440, %v440
        %v593 = vpack.c.bf16 %v443, %v443
        %v594 = vpack.c.bf16 %v445, %v445
        %v595 = vpack.c.bf16 %v448, %v448
        %v596 = vpack.c.bf16 %v450, %v450
        %v597 = vpack.c.bf16 %v453, %v453
        %v598 = vpack.c.bf16 %v455, %v455
        %v599 = vpack.c.bf16 %v458, %v458
        %v600 = vpack.c.bf16 %v460, %v460
        %v601 = vpack.c.bf16 %v463, %v463
        %v602 = vpack.c.bf16 %v465, %v465
        %v603 = vpack.c.bf16 %v468, %v468
        %v604 = vpack.c.bf16 %v470, %v470
        %v605 = vpack.c.bf16 %v473, %v473
        %v606 = vpack.c.bf16 %v475, %v475
        %v607 = vpack.c.bf16 %v478, %v478
        %v608 = vpack.c.bf16 %v480, %v480
        %v609 = vpack.c.bf16 %v483, %v483
        %v610 = vpack.c.bf16 %v485, %v485
        %v611 = vpack.c.bf16 %v488, %v488
        %v612 = vpack.c.bf16 %v490, %v490
        %vm613 = vcmask 519168
        %614 = vst.msk [vmem:[#allocation2] sm:$0xf] %vm613, %v581
        %615 = vst.msk [vmem:[#allocation2 + $0x4] sm:$0xf] %vm613, %v582
        %616 = vst.msk [vmem:[#allocation2 + $0x8] sm:$0xf] %vm613, %v583
        %617 = vst.msk [vmem:[#allocation2 + $0xc] sm:$0xf] %vm613, %v584
        %618 = vst.msk [vmem:[#allocation2 + $0x10] sm:$0xf] %vm613, %v585
        %619 = vst.msk [vmem:[#allocation2 + $0x14] sm:$0xf] %vm613, %v586
        %620 = vst.msk [vmem:[#allocation2 + $0x18] sm:$0xf] %vm613, %v587
        %621 = vst.msk [vmem:[#allocation2 + $0x1c] sm:$0xf] %vm613, %v588
        %622 = vst.msk [vmem:[#allocation2 + $0x20] sm:$0xf] %vm613, %v589
        %623 = vst.msk [vmem:[#allocation2 + $0x24] sm:$0xf] %vm613, %v590
        %624 = vst.msk [vmem:[#allocation2 + $0x28] sm:$0xf] %vm613, %v591
        %625 = vst.msk [vmem:[#allocation2 + $0x2c] sm:$0xf] %vm613, %v592
        %626 = vst.msk [vmem:[#allocation2 + $0x30] sm:$0xf] %vm613, %v593
        %627 = vst.msk [vmem:[#allocation2 + $0x34] sm:$0xf] %vm613, %v594
        %628 = vst.msk [vmem:[#allocation2 + $0x38] sm:$0xf] %vm613, %v595
        %629 = vst.msk [vmem:[#allocation2 + $0x3c] sm:$0xf] %vm613, %v596
        %630 = vst.msk [vmem:[#allocation2 + $0x40] sm:$0xf] %vm613, %v597
        %631 = vst.msk [vmem:[#allocation2 + $0x44] sm:$0xf] %vm613, %v598
        %632 = vst.msk [vmem:[#allocation2 + $0x48] sm:$0xf] %vm613, %v599
        %633 = vst.msk [vmem:[#allocation2 + $0x4c] sm:$0xf] %vm613, %v600
        %634 = vst.msk [vmem:[#allocation2 + $0x50] sm:$0xf] %vm613, %v601
        %635 = vst.msk [vmem:[#allocation2 + $0x54] sm:$0xf] %vm613, %v602
        %636 = vst.msk [vmem:[#allocation2 + $0x58] sm:$0xf] %vm613, %v603
        %637 = vst.msk [vmem:[#allocation2 + $0x5c] sm:$0xf] %vm613, %v604
        %638 = vst.msk [vmem:[#allocation2 + $0x60] sm:$0xf] %vm613, %v605
        %639 = vst.msk [vmem:[#allocation2 + $0x64] sm:$0xf] %vm613, %v606
        %640 = vst.msk [vmem:[#allocation2 + $0x68] sm:$0xf] %vm613, %v607
        %641 = vst.msk [vmem:[#allocation2 + $0x6c] sm:$0xf] %vm613, %v608
        %642 = vst.msk [vmem:[#allocation2 + $0x70] sm:$0xf] %vm613, %v609
        %643 = vst.msk [vmem:[#allocation2 + $0x74] sm:$0xf] %vm613, %v610
        %644 = vst.msk [vmem:[#allocation2 + $0x78] sm:$0xf] %vm613, %v611
        %645 = vst.msk [vmem:[#allocation2 + $0x7c] sm:$0xf] %vm613, %v612
        %v646 = vmax.f32 %v413, %v433
        %v647 = vmax.f32 %v415, %v435
        %v648 = vmax.f32 %v418, %v438
        %v649 = vmax.f32 %v420, %v440
        %v650 = vmax.f32 %v423, %v443
        %v651 = vmax.f32 %v425, %v445
        %v652 = vmax.f32 %v428, %v448
        %v653 = vmax.f32 %v430, %v450
        %v654 = vmax.f32 %v453, %v473
        %v655 = vmax.f32 %v455, %v475
        %v656 = vmax.f32 %v458, %v478
        %v657 = vmax.f32 %v460, %v480
        %v658 = vmax.f32 %v463, %v483
        %v659 = vmax.f32 %v465, %v485
        %v660 = vmax.f32 %v468, %v488
        %v661 = vmax.f32 %v470, %v490
        %v662 = vmax.f32 %v646, %v654
        %v663 = vmax.f32 %v647, %v655
        %v664 = vmax.f32 %v648, %v656
        %v665 = vmax.f32 %v649, %v657
        %v666 = vmax.f32 %v650, %v658
        %v667 = vmax.f32 %v651, %v659
        %v668 = vmax.f32 %v652, %v660
        %v669 = vmax.f32 %v653, %v661
        %v670 = vmax.f32 %v502, %v522
        %v671 = vmax.f32 %v504, %v524
        %v672 = vmax.f32 %v507, %v527
        %v673 = vmax.f32 %v509, %v529
        %v674 = vmax.f32 %v512, %v532
        %v675 = vmax.f32 %v514, %v534
        %v676 = vmax.f32 %v517, %v537
        %v677 = vmax.f32 %v519, %v539
        %v678 = vmax.f32 %v542, %v562
        %v679 = vmax.f32 %v544, %v564
        %v680 = vmax.f32 %v547, %v567
        %v681 = vmax.f32 %v549, %v569
        %v682 = vmax.f32 %v552, %v572
        %v683 = vmax.f32 %v554, %v574
        %v684 = vmax.f32 %v557, %v577
        %v685 = vmax.f32 %v559, %v579
        %v686 = vmax.f32 %v670, %v678
        %v687 = vmax.f32 %v671, %v679
        %v688 = vmax.f32 %v672, %v680
        %v689 = vmax.f32 %v673, %v681
        %v690 = vmax.f32 %v674, %v682
        %v691 = vmax.f32 %v675, %v683
        %v692 = vmax.f32 %v676, %v684
        %v693 = vmax.f32 %v677, %v685
        %694 = vst.msk [vmem:[#allocation3] sm:$0xf] %vm613, 0
        %695 = vst.msk [vmem:[#allocation3 + $0x4] sm:$0xf] %vm613, 0
        %696 = vst.msk [vmem:[#allocation3 + $0x8] sm:$0xf] %vm613, 0
        %697 = vst.msk [vmem:[#allocation3 + $0xc] sm:$0xf] %vm613, 0
        %698 = vst.msk [vmem:[#allocation3 + $0x10] sm:$0xf] %vm613, 0
        %699 = vst.msk [vmem:[#allocation3 + $0x14] sm:$0xf] %vm613, 0
        %700 = vst.msk [vmem:[#allocation3 + $0x18] sm:$0xf] %vm613, 0
        %701 = vst.msk [vmem:[#allocation3 + $0x1c] sm:$0xf] %vm613, 0
        %702 = vst.msk [vmem:[#allocation3 + $0x20] sm:$0xf] %vm613, 0
        %703 = vst.msk [vmem:[#allocation3 + $0x24] sm:$0xf] %vm613, 0
        %704 = vst.msk [vmem:[#allocation3 + $0x28] sm:$0xf] %vm613, 0
        %705 = vst.msk [vmem:[#allocation3 + $0x2c] sm:$0xf] %vm613, 0
        %706 = vst.msk [vmem:[#allocation3 + $0x30] sm:$0xf] %vm613, 0
        %707 = vst.msk [vmem:[#allocation3 + $0x34] sm:$0xf] %vm613, 0
        %708 = vst.msk [vmem:[#allocation3 + $0x38] sm:$0xf] %vm613, 0
        %709 = vst.msk [vmem:[#allocation3 + $0x3c] sm:$0xf] %vm613, 0
        %710 = vst.msk [vmem:[#allocation4] sm:$0xf] %vm613, 0
        %711 = vst.msk [vmem:[#allocation4 + $0x4] sm:$0xf] %vm613, 0
        %712 = vst.msk [vmem:[#allocation4 + $0x8] sm:$0xf] %vm613, 0
        %713 = vst.msk [vmem:[#allocation4 + $0xc] sm:$0xf] %vm613, 0
        %714 = vst.msk [vmem:[#allocation4 + $0x10] sm:$0xf] %vm613, 0
        %715 = vst.msk [vmem:[#allocation4 + $0x14] sm:$0xf] %vm613, 0
        %716 = vst.msk [vmem:[#allocation4 + $0x18] sm:$0xf] %vm613, 0
        %717 = vst.msk [vmem:[#allocation4 + $0x1c] sm:$0xf] %vm613, 0
        %718 = vst.msk [vmem:[#allocation4 + $0x20] sm:$0xf] %vm613, 0
        %719 = vst.msk [vmem:[#allocation4 + $0x24] sm:$0xf] %vm613, 0
        %720 = vst.msk [vmem:[#allocation4 + $0x28] sm:$0xf] %vm613, 0
        %721 = vst.msk [vmem:[#allocation4 + $0x2c] sm:$0xf] %vm613, 0
        %722 = vst.msk [vmem:[#allocation4 + $0x30] sm:$0xf] %vm613, 0
        %723 = vst.msk [vmem:[#allocation4 + $0x34] sm:$0xf] %vm613, 0
        %724 = vst.msk [vmem:[#allocation4 + $0x38] sm:$0xf] %vm613, 0
        %725 = vst.msk [vmem:[#allocation4 + $0x3c] sm:$0xf] %vm613, 0
        %v726 = vpack.c.bf16 %v662, %v662
        %v727 = vpack.c.bf16 %v663, %v663
        %v728 = vpack.c.bf16 %v664, %v664
        %v729 = vpack.c.bf16 %v665, %v665
        %v730 = vpack.c.bf16 %v666, %v666
        %v731 = vpack.c.bf16 %v667, %v667
        %v732 = vpack.c.bf16 %v668, %v668
        %v733 = vpack.c.bf16 %v669, %v669
        %742 = vrot.lane.b32.xlu0 %v726, 64
        %v743 = vpop.permute.xlu0 %742
        %744 = vrot.lane.b32.xlu0 %v727, 64
        %v745 = vpop.permute.xlu0 %744
        %746 = vrot.lane.b32.xlu0 %v728, 64
        %v747 = vpop.permute.xlu0 %746
        %748 = vrot.lane.b32.xlu0 %v729, 64
        %v749 = vpop.permute.xlu0 %748
        %750 = vrot.lane.b32.xlu0 %v730, 64
        %v751 = vpop.permute.xlu0 %750
        %752 = vrot.lane.b32.xlu0 %v731, 64
        %v753 = vpop.permute.xlu0 %752
        %754 = vrot.lane.b32.xlu0 %v732, 64
        %v755 = vpop.permute.xlu0 %754
        %756 = vrot.lane.b32.xlu0 %v733, 64
        %v757 = vpop.permute.xlu0 %756
        %766 = vst.msk [vmem:[#allocation3] sm:$0xf] %vm613, %v743
        %767 = vst.msk [vmem:[#allocation3 + $0x4] sm:$0xf] %vm613, %v745
        %768 = vst.msk [vmem:[#allocation3 + $0x8] sm:$0xf] %vm613, %v747
        %769 = vst.msk [vmem:[#allocation3 + $0xc] sm:$0xf] %vm613, %v749
        %770 = vst.msk [vmem:[#allocation3 + $0x10] sm:$0xf] %vm613, %v751
        %771 = vst.msk [vmem:[#allocation3 + $0x14] sm:$0xf] %vm613, %v753
        %772 = vst.msk [vmem:[#allocation3 + $0x18] sm:$0xf] %vm613, %v755
        %773 = vst.msk [vmem:[#allocation3 + $0x1c] sm:$0xf] %vm613, %v757
        %v774 = vpack.c.bf16 %v686, %v686
        %v775 = vpack.c.bf16 %v687, %v687
        %v776 = vpack.c.bf16 %v688, %v688
        %v777 = vpack.c.bf16 %v689, %v689
        %v778 = vpack.c.bf16 %v690, %v690
        %v779 = vpack.c.bf16 %v691, %v691
        %v780 = vpack.c.bf16 %v692, %v692
        %v781 = vpack.c.bf16 %v693, %v693
        %782 = vst.msk [vmem:[#allocation4] sm:$0xf] %vm613, %v774
        %783 = vst.msk [vmem:[#allocation4 + $0x4] sm:$0xf] %vm613, %v775
        %784 = vst.msk [vmem:[#allocation4 + $0x8] sm:$0xf] %vm613, %v776
        %785 = vst.msk [vmem:[#allocation4 + $0xc] sm:$0xf] %vm613, %v777
        %786 = vst.msk [vmem:[#allocation4 + $0x10] sm:$0xf] %vm613, %v778
        %787 = vst.msk [vmem:[#allocation4 + $0x14] sm:$0xf] %vm613, %v779
        %788 = vst.msk [vmem:[#allocation4 + $0x18] sm:$0xf] %vm613, %v780
        %789 = vst.msk [vmem:[#allocation4 + $0x1c] sm:$0xf] %vm613, %v781
      $region44: #{nl_block_nd_forward.1} parent=39 // pred_fallthru
        _
      %s790 = smul.u32 %s21, 256
      %s791 = scalar_lea.vmem %s237, %s790
      %v792 = vld [vmem:[%s791] sm:$0xff]
      %v793 = vld [vmem:[%s791 + $0x8] sm:$0xff]
      %v794 = vld [vmem:[%s791 + $0x10] sm:$0xff]
      %v795 = vld [vmem:[%s791 + $0x18] sm:$0xff]
      %v796 = vld [vmem:[%s791 + $0x20] sm:$0xff]
      %v797 = vld [vmem:[%s791 + $0x28] sm:$0xff]
      %v798 = vld [vmem:[%s791 + $0x30] sm:$0xff]
      %v799 = vld [vmem:[%s791 + $0x38] sm:$0xff]
      %v800 = vld [vmem:[%s791 + $0x40] sm:$0xff]
      %v801 = vld [vmem:[%s791 + $0x48] sm:$0xff]
      %v802 = vld [vmem:[%s791 + $0x50] sm:$0xff]
      %v803 = vld [vmem:[%s791 + $0x58] sm:$0xff]
      %v804 = vld [vmem:[%s791 + $0x60] sm:$0xff]
      %v805 = vld [vmem:[%s791 + $0x68] sm:$0xff]
      %v806 = vld [vmem:[%s791 + $0x70] sm:$0xff]
      %v807 = vld [vmem:[%s791 + $0x78] sm:$0xff]
      %v808 = vld [vmem:[%s791 + $0x80] sm:$0xff]
      %v809 = vld [vmem:[%s791 + $0x88] sm:$0xff]
      %v810 = vld [vmem:[%s791 + $0x90] sm:$0xff]
      %v811 = vld [vmem:[%s791 + $0x98] sm:$0xff]
      %v812 = vld [vmem:[%s791 + $0xa0] sm:$0xff]
      %v813 = vld [vmem:[%s791 + $0xa8] sm:$0xff]
      %v814 = vld [vmem:[%s791 + $0xb0] sm:$0xff]
      %v815 = vld [vmem:[%s791 + $0xb8] sm:$0xff]
      %v816 = vld [vmem:[%s791 + $0xc0] sm:$0xff]
      %v817 = vld [vmem:[%s791 + $0xc8] sm:$0xff]
      %v818 = vld [vmem:[%s791 + $0xd0] sm:$0xff]
      %v819 = vld [vmem:[%s791 + $0xd8] sm:$0xff]
      %v820 = vld [vmem:[%s791 + $0xe0] sm:$0xff]
      %v821 = vld [vmem:[%s791 + $0xe8] sm:$0xff]
      %v822 = vld [vmem:[%s791 + $0xf0] sm:$0xff]
      %v823 = vld [vmem:[%s791 + $0xf8] sm:$0xff]
      %s824 = sshra.s32 %s790, 3
      %s825 = sand.u32 %s790, 7
      %s826 = smul.addr %s824, 4
      %s827 = scalar_lea.vmem [#allocation2], %s826
      %v828 = vld [vmem:[%s827] sm:$0xf]
      %v829 = vld [vmem:[%s827 + $0x4] sm:$0xf]
      %v830 = vld [vmem:[%s827 + $0x8] sm:$0xf]
      %v831 = vld [vmem:[%s827 + $0xc] sm:$0xf]
      %v832 = vld [vmem:[%s827 + $0x10] sm:$0xf]
      %v833 = vld [vmem:[%s827 + $0x14] sm:$0xf]
      %v834 = vld [vmem:[%s827 + $0x18] sm:$0xf]
      %v835 = vld [vmem:[%s827 + $0x1c] sm:$0xf]
      %v836 = vld [vmem:[%s827 + $0x20] sm:$0xf]
      %v837 = vld [vmem:[%s827 + $0x24] sm:$0xf]
      %v838 = vld [vmem:[%s827 + $0x28] sm:$0xf]
      %v839 = vld [vmem:[%s827 + $0x2c] sm:$0xf]
      %v840 = vld [vmem:[%s827 + $0x30] sm:$0xf]
      %v841 = vld [vmem:[%s827 + $0x34] sm:$0xf]
      %v842 = vld [vmem:[%s827 + $0x38] sm:$0xf]
      %v843 = vld [vmem:[%s827 + $0x3c] sm:$0xf]
      %v844 = vld [vmem:[%s827 + $0x40] sm:$0xf]
      %v845 = vld [vmem:[%s827 + $0x44] sm:$0xf]
      %v846 = vld [vmem:[%s827 + $0x48] sm:$0xf]
      %v847 = vld [vmem:[%s827 + $0x4c] sm:$0xf]
      %v848 = vld [vmem:[%s827 + $0x50] sm:$0xf]
      %v849 = vld [vmem:[%s827 + $0x54] sm:$0xf]
      %v850 = vld [vmem:[%s827 + $0x58] sm:$0xf]
      %v851 = vld [vmem:[%s827 + $0x5c] sm:$0xf]
      %v852 = vld [vmem:[%s827 + $0x60] sm:$0xf]
      %v853 = vld [vmem:[%s827 + $0x64] sm:$0xf]
      %v854 = vld [vmem:[%s827 + $0x68] sm:$0xf]
      %v855 = vld [vmem:[%s827 + $0x6c] sm:$0xf]
      %v856 = vld [vmem:[%s827 + $0x70] sm:$0xf]
      %v857 = vld [vmem:[%s827 + $0x74] sm:$0xf]
      %v858 = vld [vmem:[%s827 + $0x78] sm:$0xf]
      %v859 = vld [vmem:[%s827 + $0x7c] sm:$0xf]
      %v860 = vld [vmem:[#allocation3] sm:$0xf]
      %v861 = vld [vmem:[#allocation3 + $0x4] sm:$0xf]
      %v862 = vld [vmem:[#allocation3 + $0x8] sm:$0xf]
      %v863 = vld [vmem:[#allocation3 + $0xc] sm:$0xf]
      %v864 = vld [vmem:[#allocation3 + $0x10] sm:$0xf]
      %v865 = vld [vmem:[#allocation3 + $0x14] sm:$0xf]
      %v866 = vld [vmem:[#allocation3 + $0x18] sm:$0xf]
      %v867 = vld [vmem:[#allocation3 + $0x1c] sm:$0xf]
      %v868 = vld [vmem:[#allocation3 + $0x20] sm:$0xf]
      %v869 = vld [vmem:[#allocation3 + $0x24] sm:$0xf]
      %v870 = vld [vmem:[#allocation3 + $0x28] sm:$0xf]
      %v871 = vld [vmem:[#allocation3 + $0x2c] sm:$0xf]
      %v872 = vld [vmem:[#allocation3 + $0x30] sm:$0xf]
      %v873 = vld [vmem:[#allocation3 + $0x34] sm:$0xf]
      %v874 = vld [vmem:[#allocation3 + $0x38] sm:$0xf]
      %v875 = vld [vmem:[#allocation3 + $0x3c] sm:$0xf]
      %v908 = vunpack.c.l.b16 %v828
      %v909 = vunpack.c.l.b16 %v829
      %v910 = vunpack.c.l.b16 %v830
      %v911 = vunpack.c.l.b16 %v831
      %v912 = vunpack.c.l.b16 %v832
      %v913 = vunpack.c.l.b16 %v833
      %v914 = vunpack.c.l.b16 %v834
      %v915 = vunpack.c.l.b16 %v835
      %v916 = vunpack.c.l.b16 %v836
      %v917 = vunpack.c.l.b16 %v837
      %v918 = vunpack.c.l.b16 %v838
      %v919 = vunpack.c.l.b16 %v839
      %v920 = vunpack.c.l.b16 %v840
      %v921 = vunpack.c.l.b16 %v841
      %v922 = vunpack.c.l.b16 %v842
      %v923 = vunpack.c.l.b16 %v843
      %v924 = vunpack.c.l.b16 %v844
      %v925 = vunpack.c.l.b16 %v845
      %v926 = vunpack.c.l.b16 %v846
      %v927 = vunpack.c.l.b16 %v847
      %v928 = vunpack.c.l.b16 %v848
      %v929 = vunpack.c.l.b16 %v849
      %v930 = vunpack.c.l.b16 %v850
      %v931 = vunpack.c.l.b16 %v851
      %v932 = vunpack.c.l.b16 %v852
      %v933 = vunpack.c.l.b16 %v853
      %v934 = vunpack.c.l.b16 %v854
      %v935 = vunpack.c.l.b16 %v855
      %v936 = vunpack.c.l.b16 %v856
      %v937 = vunpack.c.l.b16 %v857
      %v938 = vunpack.c.l.b16 %v858
      %v939 = vunpack.c.l.b16 %v859
      %v940 = vpack.c.b16 %v909, %v908
      %v941 = vpack.c.b16 %v911, %v910
      %v942 = vpack.c.b16 %v913, %v912
      %v943 = vpack.c.b16 %v915, %v914
      %v944 = vpack.c.b16 %v917, %v916
      %v945 = vpack.c.b16 %v919, %v918
      %v946 = vpack.c.b16 %v921, %v920
      %v947 = vpack.c.b16 %v923, %v922
      %v948 = vpack.c.b16 %v925, %v924
      %v949 = vpack.c.b16 %v927, %v926
      %v950 = vpack.c.b16 %v929, %v928
      %v951 = vpack.c.b16 %v931, %v930
      %v952 = vpack.c.b16 %v933, %v932
      %v953 = vpack.c.b16 %v935, %v934
      %v954 = vpack.c.b16 %v937, %v936
      %v955 = vpack.c.b16 %v939, %v938
      %v972 = vunpack.c.l.b16 %v860
      %v973 = vunpack.c.l.b16 %v861
      %v974 = vunpack.c.l.b16 %v862
      %v975 = vunpack.c.l.b16 %v863
      %v976 = vunpack.c.l.b16 %v864
      %v977 = vunpack.c.l.b16 %v865
      %v978 = vunpack.c.l.b16 %v866
      %v979 = vunpack.c.l.b16 %v867
      %v980 = vunpack.c.l.b16 %v868
      %v981 = vunpack.c.l.b16 %v869
      %v982 = vunpack.c.l.b16 %v870
      %v983 = vunpack.c.l.b16 %v871
      %v984 = vunpack.c.l.b16 %v872
      %v985 = vunpack.c.l.b16 %v873
      %v986 = vunpack.c.l.b16 %v874
      %v987 = vunpack.c.l.b16 %v875
      %v988 = vpack.c.b16 %v973, %v972
      %v989 = vpack.c.b16 %v975, %v974
      %v990 = vpack.c.b16 %v977, %v976
      %v991 = vpack.c.b16 %v979, %v978
      %v992 = vpack.c.b16 %v981, %v980
      %v993 = vpack.c.b16 %v983, %v982
      %v994 = vpack.c.b16 %v985, %v984
      %v995 = vpack.c.b16 %v987, %v986
      %vm996 = vcmask 523264
      %v998 = vsel %vm996, %v940, 0
      %v1001 = vsel %vm996, %v941, 0
      %v1004 = vsel %vm996, %v942, 0
      %v1007 = vsel %vm996, %v943, 0
      %v1010 = vsel %vm996, %v944, 0
      %v1013 = vsel %vm996, %v945, 0
      %v1016 = vsel %vm996, %v946, 0
      %v1019 = vsel %vm996, %v947, 0
      %v1022 = vsel %vm996, %v948, 0
      %v1025 = vsel %vm996, %v949, 0
      %v1028 = vsel %vm996, %v950, 0
      %v1031 = vsel %vm996, %v951, 0
      %v1034 = vsel %vm996, %v952, 0
      %v1037 = vsel %vm996, %v953, 0
      %v1040 = vsel %vm996, %v954, 0
      %v1043 = vsel %vm996, %v955, 0
      %v1046 = vsel %vm996, %v988, 0
      %v1049 = vsel %vm996, %v989, 0
      %v1052 = vsel %vm996, %v990, 0
      %v1055 = vsel %vm996, %v991, 0
      %v1058 = vsel %vm996, %v992, 0
      %v1061 = vsel %vm996, %v993, 0
      %v1064 = vsel %vm996, %v994, 0
      %v1067 = vsel %vm996, %v995, 0
      %1069 = vmatpush.bf16.xpose.msra.mxu0 %v1067
      %1070 = vmatpush.bf16.xpose.msra.mxu0 %v1064
      %1071 = vmatpush.bf16.xpose.msra.mxu0 %v1061
      %1072 = vmatpush.bf16.xpose.msra.mxu0 %v1058
      %1073 = vmatpush.bf16.xpose.msra.mxu0 %v1055
      %1074 = vmatpush.bf16.xpose.msra.mxu0 %v1052
      %1075 = vmatpush.bf16.xpose.msra.mxu0 %v1049
      %1076 = vmatpush.bf16.xpose.msra.mxu0 %v1046
      %1077 = vmatmul.bf16.gmra.mxu0 %v998
      %v1078 = vpop.f32.mrf.mxu0
      %v1079 = vadd.f32 0.0, %v1078
      %v1080 = vpop.f32.mrf.mxu0
      %v1081 = vadd.f32 0.0, %v1080
      %1082 = vmatmul.bf16.gmra.mxu0 %v1001
      %v1083 = vpop.f32.mrf.mxu0
      %v1084 = vadd.f32 0.0, %v1083
      %v1085 = vpop.f32.mrf.mxu0
      %v1086 = vadd.f32 0.0, %v1085
      %1087 = vmatmul.bf16.gmra.mxu0 %v1004
      %v1088 = vpop.f32.mrf.mxu0
      %v1089 = vadd.f32 0.0, %v1088
      %v1090 = vpop.f32.mrf.mxu0
      %v1091 = vadd.f32 0.0, %v1090
      %1092 = vmatmul.bf16.gmra.mxu0 %v1007
      %v1093 = vpop.f32.mrf.mxu0
      %v1094 = vadd.f32 0.0, %v1093
      %v1095 = vpop.f32.mrf.mxu0
      %v1096 = vadd.f32 0.0, %v1095
      %1097 = vmatmul.bf16.gmra.mxu0 %v1010
      %v1098 = vpop.f32.mrf.mxu0
      %v1099 = vadd.f32 0.0, %v1098
      %v1100 = vpop.f32.mrf.mxu0
      %v1101 = vadd.f32 0.0, %v1100
      %1102 = vmatmul.bf16.gmra.mxu0 %v1013
      %v1103 = vpop.f32.mrf.mxu0
      %v1104 = vadd.f32 0.0, %v1103
      %v1105 = vpop.f32.mrf.mxu0
      %v1106 = vadd.f32 0.0, %v1105
      %1107 = vmatmul.bf16.gmra.mxu0 %v1016
      %v1108 = vpop.f32.mrf.mxu0
      %v1109 = vadd.f32 0.0, %v1108
      %v1110 = vpop.f32.mrf.mxu0
      %v1111 = vadd.f32 0.0, %v1110
      %1112 = vmatmul.bf16.gmra.mxu0 %v1019
      %v1113 = vpop.f32.mrf.mxu0
      %v1114 = vadd.f32 0.0, %v1113
      %v1115 = vpop.f32.mrf.mxu0
      %v1116 = vadd.f32 0.0, %v1115
      %1117 = vmatmul.bf16.gmra.mxu0 %v1022
      %v1118 = vpop.f32.mrf.mxu0
      %v1119 = vadd.f32 0.0, %v1118
      %v1120 = vpop.f32.mrf.mxu0
      %v1121 = vadd.f32 0.0, %v1120
      %1122 = vmatmul.bf16.gmra.mxu0 %v1025
      %v1123 = vpop.f32.mrf.mxu0
      %v1124 = vadd.f32 0.0, %v1123
      %v1125 = vpop.f32.mrf.mxu0
      %v1126 = vadd.f32 0.0, %v1125
      %1127 = vmatmul.bf16.gmra.mxu0 %v1028
      %v1128 = vpop.f32.mrf.mxu0
      %v1129 = vadd.f32 0.0, %v1128
      %v1130 = vpop.f32.mrf.mxu0
      %v1131 = vadd.f32 0.0, %v1130
      %1132 = vmatmul.bf16.gmra.mxu0 %v1031
      %v1133 = vpop.f32.mrf.mxu0
      %v1134 = vadd.f32 0.0, %v1133
      %v1135 = vpop.f32.mrf.mxu0
      %v1136 = vadd.f32 0.0, %v1135
      %1137 = vmatmul.bf16.gmra.mxu0 %v1034
      %v1138 = vpop.f32.mrf.mxu0
      %v1139 = vadd.f32 0.0, %v1138
      %v1140 = vpop.f32.mrf.mxu0
      %v1141 = vadd.f32 0.0, %v1140
      %1142 = vmatmul.bf16.gmra.mxu0 %v1037
      %v1143 = vpop.f32.mrf.mxu0
      %v1144 = vadd.f32 0.0, %v1143
      %v1145 = vpop.f32.mrf.mxu0
      %v1146 = vadd.f32 0.0, %v1145
      %1147 = vmatmul.bf16.gmra.mxu0 %v1040
      %v1148 = vpop.f32.mrf.mxu0
      %v1149 = vadd.f32 0.0, %v1148
      %v1150 = vpop.f32.mrf.mxu0
      %v1151 = vadd.f32 0.0, %v1150
      %1152 = vmatmul.bf16.gmra.mxu0 %v1043
      %v1153 = vpop.f32.mrf.mxu0
      %v1154 = vadd.f32 0.0, %v1153
      %v1155 = vpop.f32.mrf.mxu0
      %v1156 = vadd.f32 0.0, %v1155
      %1157 = vdwg.mxu0
      %v1158 = vlaneseq
      %v1159 = vand.u32 %v1158, 127
      %vm1160 = vcmp.lt.s32.totalorder %v1159, 64
      %v1161 = vsel %vm1160, %v1079, -inf
      %v1162 = vsel %vm1160, %v1081, -inf
      %v1163 = vsel %vm1160, %v1084, -inf
      %v1164 = vsel %vm1160, %v1086, -inf
      %v1165 = vsel %vm1160, %v1089, -inf
      %v1166 = vsel %vm1160, %v1091, -inf
      %v1167 = vsel %vm1160, %v1094, -inf
      %v1168 = vsel %vm1160, %v1096, -inf
      %v1169 = vsel %vm1160, %v1099, -inf
      %v1170 = vsel %vm1160, %v1101, -inf
      %v1171 = vsel %vm1160, %v1104, -inf
      %v1172 = vsel %vm1160, %v1106, -inf
      %v1173 = vsel %vm1160, %v1109, -inf
      %v1174 = vsel %vm1160, %v1111, -inf
      %v1175 = vsel %vm1160, %v1114, -inf
      %v1176 = vsel %vm1160, %v1116, -inf
      %v1177 = vsel %vm1160, %v1119, -inf
      %v1178 = vsel %vm1160, %v1121, -inf
      %v1179 = vsel %vm1160, %v1124, -inf
      %v1180 = vsel %vm1160, %v1126, -inf
      %v1181 = vsel %vm1160, %v1129, -inf
      %v1182 = vsel %vm1160, %v1131, -inf
      %v1183 = vsel %vm1160, %v1134, -inf
      %v1184 = vsel %vm1160, %v1136, -inf
      %v1185 = vsel %vm1160, %v1139, -inf
      %v1186 = vsel %vm1160, %v1141, -inf
      %v1187 = vsel %vm1160, %v1144, -inf
      %v1188 = vsel %vm1160, %v1146, -inf
      %v1189 = vsel %vm1160, %v1149, -inf
      %v1190 = vsel %vm1160, %v1151, -inf
      %v1191 = vsel %vm1160, %v1154, -inf
      %v1192 = vsel %vm1160, %v1156, -inf
      %1193 = vmax.xlane.f32.xlu0 %v1161
      %v1194 = vpop.xlane.xlu0 %1193
      %1195 = vmax.xlane.f32.xlu0 %v1162
      %v1196 = vpop.xlane.xlu0 %1195
      %1197 = vmax.xlane.f32.xlu0 %v1163
      %v1198 = vpop.xlane.xlu0 %1197
      %1199 = vmax.xlane.f32.xlu0 %v1164
      %v1200 = vpop.xlane.xlu0 %1199
      %1201 = vmax.xlane.f32.xlu0 %v1165
      %v1202 = vpop.xlane.xlu0 %1201
      %1203 = vmax.xlane.f32.xlu0 %v1166
      %v1204 = vpop.xlane.xlu0 %1203
      %1205 = vmax.xlane.f32.xlu0 %v1167
      %v1206 = vpop.xlane.xlu0 %1205
      %1207 = vmax.xlane.f32.xlu0 %v1168
      %v1208 = vpop.xlane.xlu0 %1207
      %1209 = vmax.xlane.f32.xlu0 %v1169
      %v1210 = vpop.xlane.xlu0 %1209
      %1211 = vmax.xlane.f32.xlu0 %v1170
      %v1212 = vpop.xlane.xlu0 %1211
      %1213 = vmax.xlane.f32.xlu0 %v1171
      %v1214 = vpop.xlane.xlu0 %1213
      %1215 = vmax.xlane.f32.xlu0 %v1172
      %v1216 = vpop.xlane.xlu0 %1215
      %1217 = vmax.xlane.f32.xlu0 %v1173
      %v1218 = vpop.xlane.xlu0 %1217
      %1219 = vmax.xlane.f32.xlu0 %v1174
      %v1220 = vpop.xlane.xlu0 %1219
      %1221 = vmax.xlane.f32.xlu0 %v1175
      %v1222 = vpop.xlane.xlu0 %1221
      %1223 = vmax.xlane.f32.xlu0 %v1176
      %v1224 = vpop.xlane.xlu0 %1223
      %1225 = vmax.xlane.f32.xlu0 %v1177
      %v1226 = vpop.xlane.xlu0 %1225
      %1227 = vmax.xlane.f32.xlu0 %v1178
      %v1228 = vpop.xlane.xlu0 %1227
      %1229 = vmax.xlane.f32.xlu0 %v1179
      %v1230 = vpop.xlane.xlu0 %1229
      %1231 = vmax.xlane.f32.xlu0 %v1180
      %v1232 = vpop.xlane.xlu0 %1231
      %1233 = vmax.xlane.f32.xlu0 %v1181
      %v1234 = vpop.xlane.xlu0 %1233
      %1235 = vmax.xlane.f32.xlu0 %v1182
      %v1236 = vpop.xlane.xlu0 %1235
      %1237 = vmax.xlane.f32.xlu0 %v1183
      %v1238 = vpop.xlane.xlu0 %1237
      %1239 = vmax.xlane.f32.xlu0 %v1184
      %v1240 = vpop.xlane.xlu0 %1239
      %1241 = vmax.xlane.f32.xlu0 %v1185
      %v1242 = vpop.xlane.xlu0 %1241
      %1243 = vmax.xlane.f32.xlu0 %v1186
      %v1244 = vpop.xlane.xlu0 %1243
      %1245 = vmax.xlane.f32.xlu0 %v1187
      %v1246 = vpop.xlane.xlu0 %1245
      %1247 = vmax.xlane.f32.xlu0 %v1188
      %v1248 = vpop.xlane.xlu0 %1247
      %1249 = vmax.xlane.f32.xlu0 %v1189
      %v1250 = vpop.xlane.xlu0 %1249
      %1251 = vmax.xlane.f32.xlu0 %v1190
      %v1252 = vpop.xlane.xlu0 %1251
      %1253 = vmax.xlane.f32.xlu0 %v1191
      %v1254 = vpop.xlane.xlu0 %1253
      %1255 = vmax.xlane.f32.xlu0 %v1192
      %v1256 = vpop.xlane.xlu0 %1255
      %v1257 = vsub.f32 %v1161, %v1194
      %v1258 = vsub.f32 %v1162, %v1196
      %v1259 = vsub.f32 %v1163, %v1198
      %v1260 = vsub.f32 %v1164, %v1200
      %v1261 = vsub.f32 %v1165, %v1202
      %v1262 = vsub.f32 %v1166, %v1204
      %v1263 = vsub.f32 %v1167, %v1206
      %v1264 = vsub.f32 %v1168, %v1208
      %v1265 = vsub.f32 %v1169, %v1210
      %v1266 = vsub.f32 %v1170, %v1212
      %v1267 = vsub.f32 %v1171, %v1214
      %v1268 = vsub.f32 %v1172, %v1216
      %v1269 = vsub.f32 %v1173, %v1218
      %v1270 = vsub.f32 %v1174, %v1220
      %v1271 = vsub.f32 %v1175, %v1222
      %v1272 = vsub.f32 %v1176, %v1224
      %v1273 = vsub.f32 %v1177, %v1226
      %v1274 = vsub.f32 %v1178, %v1228
      %v1275 = vsub.f32 %v1179, %v1230
      %v1276 = vsub.f32 %v1180, %v1232
      %v1277 = vsub.f32 %v1181, %v1234
      %v1278 = vsub.f32 %v1182, %v1236
      %v1279 = vsub.f32 %v1183, %v1238
      %v1280 = vsub.f32 %v1184, %v1240
      %v1281 = vsub.f32 %v1185, %v1242
      %v1282 = vsub.f32 %v1186, %v1244
      %v1283 = vsub.f32 %v1187, %v1246
      %v1284 = vsub.f32 %v1188, %v1248
      %v1285 = vsub.f32 %v1189, %v1250
      %v1286 = vsub.f32 %v1190, %v1252
      %v1287 = vsub.f32 %v1191, %v1254
      %v1288 = vsub.f32 %v1192, %v1256
      %v1289 = vmul.f32 %v1257, 1.442695
      %v1290 = vpow.pop %v1289
      %v1291 = vmul.f32 %v1258, 1.442695
      %v1292 = vpow.pop %v1291
      %v1293 = vmul.f32 %v1259, 1.442695
      %v1294 = vpow.pop %v1293
      %v1295 = vmul.f32 %v1260, 1.442695
      %v1296 = vpow.pop %v1295
      %v1297 = vmul.f32 %v1261, 1.442695
      %v1298 = vpow.pop %v1297
      %v1299 = vmul.f32 %v1262, 1.442695
      %v1300 = vpow.pop %v1299
      %v1301 = vmul.f32 %v1263, 1.442695
      %v1302 = vpow.pop %v1301
      %v1303 = vmul.f32 %v1264, 1.442695
      %v1304 = vpow.pop %v1303
      %v1305 = vmul.f32 %v1265, 1.442695
      %v1306 = vpow.pop %v1305
      %v1307 = vmul.f32 %v1266, 1.442695
      %v1308 = vpow.pop %v1307
      %v1309 = vmul.f32 %v1267, 1.442695
      %v1310 = vpow.pop %v1309
      %v1311 = vmul.f32 %v1268, 1.442695
      %v1312 = vpow.pop %v1311
      %v1313 = vmul.f32 %v1269, 1.442695
      %v1314 = vpow.pop %v1313
      %v1315 = vmul.f32 %v1270, 1.442695
      %v1316 = vpow.pop %v1315
      %v1317 = vmul.f32 %v1271, 1.442695
      %v1318 = vpow.pop %v1317
      %v1319 = vmul.f32 %v1272, 1.442695
      %v1320 = vpow.pop %v1319
      %v1321 = vmul.f32 %v1273, 1.442695
      %v1322 = vpow.pop %v1321
      %v1323 = vmul.f32 %v1274, 1.442695
      %v1324 = vpow.pop %v1323
      %v1325 = vmul.f32 %v1275, 1.442695
      %v1326 = vpow.pop %v1325
      %v1327 = vmul.f32 %v1276, 1.442695
      %v1328 = vpow.pop %v1327
      %v1329 = vmul.f32 %v1277, 1.442695
      %v1330 = vpow.pop %v1329
      %v1331 = vmul.f32 %v1278, 1.442695
      %v1332 = vpow.pop %v1331
      %v1333 = vmul.f32 %v1279, 1.442695
      %v1334 = vpow.pop %v1333
      %v1335 = vmul.f32 %v1280, 1.442695
      %v1336 = vpow.pop %v1335
      %v1337 = vmul.f32 %v1281, 1.442695
      %v1338 = vpow.pop %v1337
      %v1339 = vmul.f32 %v1282, 1.442695
      %v1340 = vpow.pop %v1339
      %v1341 = vmul.f32 %v1283, 1.442695
      %v1342 = vpow.pop %v1341
      %v1343 = vmul.f32 %v1284, 1.442695
      %v1344 = vpow.pop %v1343
      %v1345 = vmul.f32 %v1285, 1.442695
      %v1346 = vpow.pop %v1345
      %v1347 = vmul.f32 %v1286, 1.442695
      %v1348 = vpow.pop %v1347
      %v1349 = vmul.f32 %v1287, 1.442695
      %v1350 = vpow.pop %v1349
      %v1351 = vmul.f32 %v1288, 1.442695
      %v1352 = vpow.pop %v1351
      %1353 = vadd.xlane.f32.xlu0 %v1290
      %v1354 = vpop.xlane.xlu0 %1353
      %1355 = vadd.xlane.f32.xlu0 %v1292
      %v1356 = vpop.xlane.xlu0 %1355
      %1357 = vadd.xlane.f32.xlu0 %v1294
      %v1358 = vpop.xlane.xlu0 %1357
      %1359 = vadd.xlane.f32.xlu0 %v1296
      %v1360 = vpop.xlane.xlu0 %1359
      %1361 = vadd.xlane.f32.xlu0 %v1298
      %v1362 = vpop.xlane.xlu0 %1361
      %1363 = vadd.xlane.f32.xlu0 %v1300
      %v1364 = vpop.xlane.xlu0 %1363
      %1365 = vadd.xlane.f32.xlu0 %v1302
      %v1366 = vpop.xlane.xlu0 %1365
      %1367 = vadd.xlane.f32.xlu0 %v1304
      %v1368 = vpop.xlane.xlu0 %1367
      %1369 = vadd.xlane.f32.xlu0 %v1306
      %v1370 = vpop.xlane.xlu0 %1369
      %1371 = vadd.xlane.f32.xlu0 %v1308
      %v1372 = vpop.xlane.xlu0 %1371
      %1373 = vadd.xlane.f32.xlu0 %v1310
      %v1374 = vpop.xlane.xlu0 %1373
      %1375 = vadd.xlane.f32.xlu0 %v1312
      %v1376 = vpop.xlane.xlu0 %1375
      %1377 = vadd.xlane.f32.xlu0 %v1314
      %v1378 = vpop.xlane.xlu0 %1377
      %1379 = vadd.xlane.f32.xlu0 %v1316
      %v1380 = vpop.xlane.xlu0 %1379
      %1381 = vadd.xlane.f32.xlu0 %v1318
      %v1382 = vpop.xlane.xlu0 %1381
      %1383 = vadd.xlane.f32.xlu0 %v1320
      %v1384 = vpop.xlane.xlu0 %1383
      %1385 = vadd.xlane.f32.xlu0 %v1322
      %v1386 = vpop.xlane.xlu0 %1385
      %1387 = vadd.xlane.f32.xlu0 %v1324
      %v1388 = vpop.xlane.xlu0 %1387
      %1389 = vadd.xlane.f32.xlu0 %v1326
      %v1390 = vpop.xlane.xlu0 %1389
      %1391 = vadd.xlane.f32.xlu0 %v1328
      %v1392 = vpop.xlane.xlu0 %1391
      %1393 = vadd.xlane.f32.xlu0 %v1330
      %v1394 = vpop.xlane.xlu0 %1393
      %1395 = vadd.xlane.f32.xlu0 %v1332
      %v1396 = vpop.xlane.xlu0 %1395
      %1397 = vadd.xlane.f32.xlu0 %v1334
      %v1398 = vpop.xlane.xlu0 %1397
      %1399 = vadd.xlane.f32.xlu0 %v1336
      %v1400 = vpop.xlane.xlu0 %1399
      %1401 = vadd.xlane.f32.xlu0 %v1338
      %v1402 = vpop.xlane.xlu0 %1401
      %1403 = vadd.xlane.f32.xlu0 %v1340
      %v1404 = vpop.xlane.xlu0 %1403
      %1405 = vadd.xlane.f32.xlu0 %v1342
      %v1406 = vpop.xlane.xlu0 %1405
      %1407 = vadd.xlane.f32.xlu0 %v1344
      %v1408 = vpop.xlane.xlu0 %1407
      %1409 = vadd.xlane.f32.xlu0 %v1346
      %v1410 = vpop.xlane.xlu0 %1409
      %1411 = vadd.xlane.f32.xlu0 %v1348
      %v1412 = vpop.xlane.xlu0 %1411
      %1413 = vadd.xlane.f32.xlu0 %v1350
      %v1414 = vpop.xlane.xlu0 %1413
      %1415 = vadd.xlane.f32.xlu0 %v1352
      %v1416 = vpop.xlane.xlu0 %1415
      %v1417 = vrcp.pop %v1354
      %v1418 = vrcp.pop %v1356
      %v1419 = vrcp.pop %v1358
      %v1420 = vrcp.pop %v1360
      %v1421 = vrcp.pop %v1362
      %v1422 = vrcp.pop %v1364
      %v1423 = vrcp.pop %v1366
      %v1424 = vrcp.pop %v1368
      %v1425 = vrcp.pop %v1370
      %v1426 = vrcp.pop %v1372
      %v1427 = vrcp.pop %v1374
      %v1428 = vrcp.pop %v1376
      %v1429 = vrcp.pop %v1378
      %v1430 = vrcp.pop %v1380
      %v1431 = vrcp.pop %v1382
      %v1432 = vrcp.pop %v1384
      %v1433 = vrcp.pop %v1386
      %v1434 = vrcp.pop %v1388
      %v1435 = vrcp.pop %v1390
      %v1436 = vrcp.pop %v1392
      %v1437 = vrcp.pop %v1394
      %v1438 = vrcp.pop %v1396
      %v1439 = vrcp.pop %v1398
      %v1440 = vrcp.pop %v1400
      %v1441 = vrcp.pop %v1402
      %v1442 = vrcp.pop %v1404
      %v1443 = vrcp.pop %v1406
      %v1444 = vrcp.pop %v1408
      %v1445 = vrcp.pop %v1410
      %v1446 = vrcp.pop %v1412
      %v1447 = vrcp.pop %v1414
      %v1448 = vrcp.pop %v1416
      %v1449 = vmul.f32 %v1290, %v1417
      %v1450 = vmul.f32 %v1292, %v1418
      %v1451 = vmul.f32 %v1294, %v1419
      %v1452 = vmul.f32 %v1296, %v1420
      %v1453 = vmul.f32 %v1298, %v1421
      %v1454 = vmul.f32 %v1300, %v1422
      %v1455 = vmul.f32 %v1302, %v1423
      %v1456 = vmul.f32 %v1304, %v1424
      %v1457 = vmul.f32 %v1306, %v1425
      %v1458 = vmul.f32 %v1308, %v1426
      %v1459 = vmul.f32 %v1310, %v1427
      %v1460 = vmul.f32 %v1312, %v1428
      %v1461 = vmul.f32 %v1314, %v1429
      %v1462 = vmul.f32 %v1316, %v1430
      %v1463 = vmul.f32 %v1318, %v1431
      %v1464 = vmul.f32 %v1320, %v1432
      %v1465 = vmul.f32 %v1322, %v1433
      %v1466 = vmul.f32 %v1324, %v1434
      %v1467 = vmul.f32 %v1326, %v1435
      %v1468 = vmul.f32 %v1328, %v1436
      %v1469 = vmul.f32 %v1330, %v1437
      %v1470 = vmul.f32 %v1332, %v1438
      %v1471 = vmul.f32 %v1334, %v1439
      %v1472 = vmul.f32 %v1336, %v1440
      %v1473 = vmul.f32 %v1338, %v1441
      %v1474 = vmul.f32 %v1340, %v1442
      %v1475 = vmul.f32 %v1342, %v1443
      %v1476 = vmul.f32 %v1344, %v1444
      %v1477 = vmul.f32 %v1346, %v1445
      %v1478 = vmul.f32 %v1348, %v1446
      %v1479 = vmul.f32 %v1350, %v1447
      %v1480 = vmul.f32 %v1352, %v1448
      %v1481 = vpack.c.bf16 %v1450, %v1449
      %v1482 = vpack.c.bf16 %v1452, %v1451
      %v1483 = vpack.c.bf16 %v1454, %v1453
      %v1484 = vpack.c.bf16 %v1456, %v1455
      %v1485 = vpack.c.bf16 %v1458, %v1457
      %v1486 = vpack.c.bf16 %v1460, %v1459
      %v1487 = vpack.c.bf16 %v1462, %v1461
      %v1488 = vpack.c.bf16 %v1464, %v1463
      %v1489 = vpack.c.bf16 %v1466, %v1465
      %v1490 = vpack.c.bf16 %v1468, %v1467
      %v1491 = vpack.c.bf16 %v1470, %v1469
      %v1492 = vpack.c.bf16 %v1472, %v1471
      %v1493 = vpack.c.bf16 %v1474, %v1473
      %v1494 = vpack.c.bf16 %v1476, %v1475
      %v1495 = vpack.c.bf16 %v1478, %v1477
      %v1496 = vpack.c.bf16 %v1480, %v1479
      %v1497 = vld [vmem:[#allocation4] sm:$0xf]
      %v1498 = vld [vmem:[#allocation4 + $0x4] sm:$0xf]
      %v1499 = vld [vmem:[#allocation4 + $0x8] sm:$0xf]
      %v1500 = vld [vmem:[#allocation4 + $0xc] sm:$0xf]
      %v1501 = vld [vmem:[#allocation4 + $0x10] sm:$0xf]
      %v1502 = vld [vmem:[#allocation4 + $0x14] sm:$0xf]
      %v1503 = vld [vmem:[#allocation4 + $0x18] sm:$0xf]
      %v1504 = vld [vmem:[#allocation4 + $0x1c] sm:$0xf]
      %v1505 = vld [vmem:[#allocation4 + $0x20] sm:$0xf]
      %v1506 = vld [vmem:[#allocation4 + $0x24] sm:$0xf]
      %v1507 = vld [vmem:[#allocation4 + $0x28] sm:$0xf]
      %v1508 = vld [vmem:[#allocation4 + $0x2c] sm:$0xf]
      %v1509 = vld [vmem:[#allocation4 + $0x30] sm:$0xf]
      %v1510 = vld [vmem:[#allocation4 + $0x34] sm:$0xf]
      %v1511 = vld [vmem:[#allocation4 + $0x38] sm:$0xf]
      %v1512 = vld [vmem:[#allocation4 + $0x3c] sm:$0xf]
      %v1529 = vunpack.c.l.b16 %v1497
      %v1530 = vunpack.c.l.b16 %v1498
      %v1531 = vunpack.c.l.b16 %v1499
      %v1532 = vunpack.c.l.b16 %v1500
      %v1533 = vunpack.c.l.b16 %v1501
      %v1534 = vunpack.c.l.b16 %v1502
      %v1535 = vunpack.c.l.b16 %v1503
      %v1536 = vunpack.c.l.b16 %v1504
      %v1537 = vunpack.c.l.b16 %v1505
      %v1538 = vunpack.c.l.b16 %v1506
      %v1539 = vunpack.c.l.b16 %v1507
      %v1540 = vunpack.c.l.b16 %v1508
      %v1541 = vunpack.c.l.b16 %v1509
      %v1542 = vunpack.c.l.b16 %v1510
      %v1543 = vunpack.c.l.b16 %v1511
      %v1544 = vunpack.c.l.b16 %v1512
      %v1545 = vpack.c.b16 %v1530, %v1529
      %v1546 = vpack.c.b16 %v1532, %v1531
      %v1547 = vpack.c.b16 %v1534, %v1533
      %v1548 = vpack.c.b16 %v1536, %v1535
      %v1549 = vpack.c.b16 %v1538, %v1537
      %v1550 = vpack.c.b16 %v1540, %v1539
      %v1551 = vpack.c.b16 %v1542, %v1541
      %v1552 = vpack.c.b16 %v1544, %v1543
      %1561 = vmatpush.bf16.msra.mxu0 %v1552
      %1562 = vmatpush.bf16.msra.mxu0 %v1551
      %1563 = vmatpush.bf16.msra.mxu0 %v1550
      %1564 = vmatpush.bf16.msra.mxu0 %v1549
      %1565 = vmatpush.bf16.msra.mxu0 %v1548
      %1566 = vmatpush.bf16.msra.mxu0 %v1547
      %1567 = vmatpush.bf16.msra.mxu0 %v1546
      %1568 = vmatpush.bf16.msra.mxu0 %v1545
      %1569 = vmatmul.bf16.gmra.mxu0 %v1481
      %v1570 = vpop.f32.mrf.mxu0
      %v1571 = vadd.f32 0.0, %v1570
      %v1572 = vpop.f32.mrf.mxu0
      %v1573 = vadd.f32 0.0, %v1572
      %1574 = vmatmul.bf16.gmra.mxu0 %v1482
      %v1575 = vpop.f32.mrf.mxu0
      %v1576 = vadd.f32 0.0, %v1575
      %v1577 = vpop.f32.mrf.mxu0
      %v1578 = vadd.f32 0.0, %v1577
      %1579 = vmatmul.bf16.gmra.mxu0 %v1483
      %v1580 = vpop.f32.mrf.mxu0
      %v1581 = vadd.f32 0.0, %v1580
      %v1582 = vpop.f32.mrf.mxu0
      %v1583 = vadd.f32 0.0, %v1582
      %1584 = vmatmul.bf16.gmra.mxu0 %v1484
      %v1585 = vpop.f32.mrf.mxu0
      %v1586 = vadd.f32 0.0, %v1585
      %v1587 = vpop.f32.mrf.mxu0
      %v1588 = vadd.f32 0.0, %v1587
      %1589 = vmatmul.bf16.gmra.mxu0 %v1485
      %v1590 = vpop.f32.mrf.mxu0
      %v1591 = vadd.f32 0.0, %v1590
      %v1592 = vpop.f32.mrf.mxu0
      %v1593 = vadd.f32 0.0, %v1592
      %1594 = vmatmul.bf16.gmra.mxu0 %v1486
      %v1595 = vpop.f32.mrf.mxu0
      %v1596 = vadd.f32 0.0, %v1595
      %v1597 = vpop.f32.mrf.mxu0
      %v1598 = vadd.f32 0.0, %v1597
      %1599 = vmatmul.bf16.gmra.mxu0 %v1487
      %v1600 = vpop.f32.mrf.mxu0
      %v1601 = vadd.f32 0.0, %v1600
      %v1602 = vpop.f32.mrf.mxu0
      %v1603 = vadd.f32 0.0, %v1602
      %1604 = vmatmul.bf16.gmra.mxu0 %v1488
      %v1605 = vpop.f32.mrf.mxu0
      %v1606 = vadd.f32 0.0, %v1605
      %v1607 = vpop.f32.mrf.mxu0
      %v1608 = vadd.f32 0.0, %v1607
      %1609 = vmatmul.bf16.gmra.mxu0 %v1489
      %v1610 = vpop.f32.mrf.mxu0
      %v1611 = vadd.f32 0.0, %v1610
      %v1612 = vpop.f32.mrf.mxu0
      %v1613 = vadd.f32 0.0, %v1612
      %1614 = vmatmul.bf16.gmra.mxu0 %v1490
      %v1615 = vpop.f32.mrf.mxu0
      %v1616 = vadd.f32 0.0, %v1615
      %v1617 = vpop.f32.mrf.mxu0
      %v1618 = vadd.f32 0.0, %v1617
      %1619 = vmatmul.bf16.gmra.mxu0 %v1491
      %v1620 = vpop.f32.mrf.mxu0
      %v1621 = vadd.f32 0.0, %v1620
      %v1622 = vpop.f32.mrf.mxu0
      %v1623 = vadd.f32 0.0, %v1622
      %1624 = vmatmul.bf16.gmra.mxu0 %v1492
      %v1625 = vpop.f32.mrf.mxu0
      %v1626 = vadd.f32 0.0, %v1625
      %v1627 = vpop.f32.mrf.mxu0
      %v1628 = vadd.f32 0.0, %v1627
      %1629 = vmatmul.bf16.gmra.mxu0 %v1493
      %v1630 = vpop.f32.mrf.mxu0
      %v1631 = vadd.f32 0.0, %v1630
      %v1632 = vpop.f32.mrf.mxu0
      %v1633 = vadd.f32 0.0, %v1632
      %1634 = vmatmul.bf16.gmra.mxu0 %v1494
      %v1635 = vpop.f32.mrf.mxu0
      %v1636 = vadd.f32 0.0, %v1635
      %v1637 = vpop.f32.mrf.mxu0
      %v1638 = vadd.f32 0.0, %v1637
      %1639 = vmatmul.bf16.gmra.mxu0 %v1495
      %v1640 = vpop.f32.mrf.mxu0
      %v1641 = vadd.f32 0.0, %v1640
      %v1642 = vpop.f32.mrf.mxu0
      %v1643 = vadd.f32 0.0, %v1642
      %1644 = vmatmul.bf16.gmra.mxu0 %v1496
      %v1645 = vpop.f32.mrf.mxu0
      %v1646 = vadd.f32 0.0, %v1645
      %v1647 = vpop.f32.mrf.mxu0
      %v1648 = vadd.f32 0.0, %v1647
      %1649 = vdwg.mxu0
      %v1650 = vpack.c.bf16 %v1573, %v1571
      %v1651 = vpack.c.bf16 %v1578, %v1576
      %v1652 = vpack.c.bf16 %v1583, %v1581
      %v1653 = vpack.c.bf16 %v1588, %v1586
      %v1654 = vpack.c.bf16 %v1593, %v1591
      %v1655 = vpack.c.bf16 %v1598, %v1596
      %v1656 = vpack.c.bf16 %v1603, %v1601
      %v1657 = vpack.c.bf16 %v1608, %v1606
      %v1658 = vpack.c.bf16 %v1613, %v1611
      %v1659 = vpack.c.bf16 %v1618, %v1616
      %v1660 = vpack.c.bf16 %v1623, %v1621
      %v1661 = vpack.c.bf16 %v1628, %v1626
      %v1662 = vpack.c.bf16 %v1633, %v1631
      %v1663 = vpack.c.bf16 %v1638, %v1636
      %v1664 = vpack.c.bf16 %v1643, %v1641
      %v1665 = vpack.c.bf16 %v1648, %v1646
      %v1666 = vld [vmem:[%s3] sm:$0xf]
      %v1667 = vld [vmem:[%s3 + $0x4] sm:$0xf]
      %v1668 = vld [vmem:[%s3 + $0x8] sm:$0xf]
      %v1669 = vld [vmem:[%s3 + $0xc] sm:$0xf]
      %v1670 = vld [vmem:[%s3 + $0x10] sm:$0xf]
      %v1671 = vld [vmem:[%s3 + $0x14] sm:$0xf]
      %v1672 = vld [vmem:[%s3 + $0x18] sm:$0xf]
      %v1673 = vld [vmem:[%s3 + $0x1c] sm:$0xf]
      %v1674 = vld [vmem:[%s4] sm:$0x1]
      %v1676 = vperm.slane %v1674, 0
      %v1686 = vunpack.c.l.b16 %v1666
      %v1687 = vunpack.c.l.b16 %v1667
      %v1688 = vunpack.c.l.b16 %v1668
      %v1689 = vunpack.c.l.b16 %v1669
      %v1690 = vunpack.c.l.b16 %v1670
      %v1691 = vunpack.c.l.b16 %v1671
      %v1692 = vunpack.c.l.b16 %v1672
      %v1693 = vunpack.c.l.b16 %v1673
      %v1694 = vpack.c.b16 %v1687, %v1686
      %v1695 = vpack.c.b16 %v1689, %v1688
      %v1696 = vpack.c.b16 %v1691, %v1690
      %v1697 = vpack.c.b16 %v1693, %v1692
      %v1703 = vsel %vm996, %v1650, 0
      %v1706 = vsel %vm996, %v1651, 0
      %v1709 = vsel %vm996, %v1652, 0
      %v1712 = vsel %vm996, %v1653, 0
      %v1715 = vsel %vm996, %v1654, 0
      %v1718 = vsel %vm996, %v1655, 0
      %v1721 = vsel %vm996, %v1656, 0
      %v1724 = vsel %vm996, %v1657, 0
      %v1727 = vsel %vm996, %v1658, 0
      %v1730 = vsel %vm996, %v1659, 0
      %v1733 = vsel %vm996, %v1660, 0
      %v1736 = vsel %vm996, %v1661, 0
      %v1739 = vsel %vm996, %v1662, 0
      %v1742 = vsel %vm996, %v1663, 0
      %v1745 = vsel %vm996, %v1664, 0
      %v1748 = vsel %vm996, %v1665, 0
      %1750 = vmatpush.bf16.msra.mxu0 0
      %1751 = vmatpush.bf16.msra.mxu0 0
      %1752 = vmatpush.bf16.msra.mxu0 0
      %1753 = vmatpush.bf16.msra.mxu0 0
      %1754 = vmatpush.bf16.msra.mxu0 %v1697
      %1755 = vmatpush.bf16.msra.mxu0 %v1696
      %1756 = vmatpush.bf16.msra.mxu0 %v1695
      %1757 = vmatpush.bf16.msra.mxu0 %v1694
      %1758 = vmatmul.bf16.gmra.mxu0 %v1703
      %v1759 = vpop.f32.mrf.mxu0
      %v1760 = vadd.f32 %v1676, %v1759
      %v1761 = vpop.f32.mrf.mxu0
      %v1762 = vadd.f32 %v1676, %v1761
      %1763 = vmatmul.bf16.gmra.mxu0 %v1706
      %v1764 = vpop.f32.mrf.mxu0
      %v1765 = vadd.f32 %v1676, %v1764
      %v1766 = vpop.f32.mrf.mxu0
      %v1767 = vadd.f32 %v1676, %v1766
      %1768 = vmatmul.bf16.gmra.mxu0 %v1709
      %v1769 = vpop.f32.mrf.mxu0
      %v1770 = vadd.f32 %v1676, %v1769
      %v1771 = vpop.f32.mrf.mxu0
      %v1772 = vadd.f32 %v1676, %v1771
      %1773 = vmatmul.bf16.gmra.mxu0 %v1712
      %v1774 = vpop.f32.mrf.mxu0
      %v1775 = vadd.f32 %v1676, %v1774
      %v1776 = vpop.f32.mrf.mxu0
      %v1777 = vadd.f32 %v1676, %v1776
      %1778 = vmatmul.bf16.gmra.mxu0 %v1715
      %v1779 = vpop.f32.mrf.mxu0
      %v1780 = vadd.f32 %v1676, %v1779
      %v1781 = vpop.f32.mrf.mxu0
      %v1782 = vadd.f32 %v1676, %v1781
      %1783 = vmatmul.bf16.gmra.mxu0 %v1718
      %v1784 = vpop.f32.mrf.mxu0
      %v1785 = vadd.f32 %v1676, %v1784
      %v1786 = vpop.f32.mrf.mxu0
      %v1787 = vadd.f32 %v1676, %v1786
      %1788 = vmatmul.bf16.gmra.mxu0 %v1721
      %v1789 = vpop.f32.mrf.mxu0
      %v1790 = vadd.f32 %v1676, %v1789
      %v1791 = vpop.f32.mrf.mxu0
      %v1792 = vadd.f32 %v1676, %v1791
      %1793 = vmatmul.bf16.gmra.mxu0 %v1724
      %v1794 = vpop.f32.mrf.mxu0
      %v1795 = vadd.f32 %v1676, %v1794
      %v1796 = vpop.f32.mrf.mxu0
      %v1797 = vadd.f32 %v1676, %v1796
      %1798 = vmatmul.bf16.gmra.mxu0 %v1727
      %v1799 = vpop.f32.mrf.mxu0
      %v1800 = vadd.f32 %v1676, %v1799
      %v1801 = vpop.f32.mrf.mxu0
      %v1802 = vadd.f32 %v1676, %v1801
      %1803 = vmatmul.bf16.gmra.mxu0 %v1730
      %v1804 = vpop.f32.mrf.mxu0
      %v1805 = vadd.f32 %v1676, %v1804
      %v1806 = vpop.f32.mrf.mxu0
      %v1807 = vadd.f32 %v1676, %v1806
      %1808 = vmatmul.bf16.gmra.mxu0 %v1733
      %v1809 = vpop.f32.mrf.mxu0
      %v1810 = vadd.f32 %v1676, %v1809
      %v1811 = vpop.f32.mrf.mxu0
      %v1812 = vadd.f32 %v1676, %v1811
      %1813 = vmatmul.bf16.gmra.mxu0 %v1736
      %v1814 = vpop.f32.mrf.mxu0
      %v1815 = vadd.f32 %v1676, %v1814
      %v1816 = vpop.f32.mrf.mxu0
      %v1817 = vadd.f32 %v1676, %v1816
      %1818 = vmatmul.bf16.gmra.mxu0 %v1739
      %v1819 = vpop.f32.mrf.mxu0
      %v1820 = vadd.f32 %v1676, %v1819
      %v1821 = vpop.f32.mrf.mxu0
      %v1822 = vadd.f32 %v1676, %v1821
      %1823 = vmatmul.bf16.gmra.mxu0 %v1742
      %v1824 = vpop.f32.mrf.mxu0
      %v1825 = vadd.f32 %v1676, %v1824
      %v1826 = vpop.f32.mrf.mxu0
      %v1827 = vadd.f32 %v1676, %v1826
      %1828 = vmatmul.bf16.gmra.mxu0 %v1745
      %v1829 = vpop.f32.mrf.mxu0
      %v1830 = vadd.f32 %v1676, %v1829
      %v1831 = vpop.f32.mrf.mxu0
      %v1832 = vadd.f32 %v1676, %v1831
      %1833 = vmatmul.bf16.gmra.mxu0 %v1748
      %v1834 = vpop.f32.mrf.mxu0
      %v1835 = vadd.f32 %v1676, %v1834
      %v1836 = vpop.f32.mrf.mxu0
      %v1837 = vadd.f32 %v1676, %v1836
      %1838 = vdwg.mxu0
      %v1839 = vadd.f32 %v1760, %v792
      %v1840 = vadd.f32 %v1762, %v793
      %v1841 = vadd.f32 %v1765, %v794
      %v1842 = vadd.f32 %v1767, %v795
      %v1843 = vadd.f32 %v1770, %v796
      %v1844 = vadd.f32 %v1772, %v797
      %v1845 = vadd.f32 %v1775, %v798
      %v1846 = vadd.f32 %v1777, %v799
      %v1847 = vadd.f32 %v1780, %v800
      %v1848 = vadd.f32 %v1782, %v801
      %v1849 = vadd.f32 %v1785, %v802
      %v1850 = vadd.f32 %v1787, %v803
      %v1851 = vadd.f32 %v1790, %v804
      %v1852 = vadd.f32 %v1792, %v805
      %v1853 = vadd.f32 %v1795, %v806
      %v1854 = vadd.f32 %v1797, %v807
      %v1855 = vadd.f32 %v1800, %v808
      %v1856 = vadd.f32 %v1802, %v809
      %v1857 = vadd.f32 %v1805, %v810
      %v1858 = vadd.f32 %v1807, %v811
      %v1859 = vadd.f32 %v1810, %v812
      %v1860 = vadd.f32 %v1812, %v813
      %v1861 = vadd.f32 %v1815, %v814
      %v1862 = vadd.f32 %v1817, %v815
      %v1863 = vadd.f32 %v1820, %v816
      %v1864 = vadd.f32 %v1822, %v817
      %v1865 = vadd.f32 %v1825, %v818
      %v1866 = vadd.f32 %v1827, %v819
      %v1867 = vadd.f32 %v1830, %v820
      %v1868 = vadd.f32 %v1832, %v821
      %v1869 = vadd.f32 %v1835, %v822
      %v1870 = vadd.f32 %v1837, %v823
      %1871 = vst [vmem:[%s246] sm:$0xff] %v1839
      %1872 = vst [vmem:[%s246 + $0x8] sm:$0xff] %v1840
      %1873 = vst [vmem:[%s246 + $0x10] sm:$0xff] %v1841
      %1874 = vst [vmem:[%s246 + $0x18] sm:$0xff] %v1842
      %1875 = vst [vmem:[%s246 + $0x20] sm:$0xff] %v1843
      %1876 = vst [vmem:[%s246 + $0x28] sm:$0xff] %v1844
      %1877 = vst [vmem:[%s246 + $0x30] sm:$0xff] %v1845
      %1878 = vst [vmem:[%s246 + $0x38] sm:$0xff] %v1846
      %1879 = vst [vmem:[%s246 + $0x40] sm:$0xff] %v1847
      %1880 = vst [vmem:[%s246 + $0x48] sm:$0xff] %v1848
      %1881 = vst [vmem:[%s246 + $0x50] sm:$0xff] %v1849
      %1882 = vst [vmem:[%s246 + $0x58] sm:$0xff] %v1850
      %1883 = vst [vmem:[%s246 + $0x60] sm:$0xff] %v1851
      %1884 = vst [vmem:[%s246 + $0x68] sm:$0xff] %v1852
      %1885 = vst [vmem:[%s246 + $0x70] sm:$0xff] %v1853
      %1886 = vst [vmem:[%s246 + $0x78] sm:$0xff] %v1854
      %1887 = vst [vmem:[%s246 + $0x80] sm:$0xff] %v1855
      %1888 = vst [vmem:[%s246 + $0x88] sm:$0xff] %v1856
      %1889 = vst [vmem:[%s246 + $0x90] sm:$0xff] %v1857
      %1890 = vst [vmem:[%s246 + $0x98] sm:$0xff] %v1858
      %1891 = vst [vmem:[%s246 + $0xa0] sm:$0xff] %v1859
      %1892 = vst [vmem:[%s246 + $0xa8] sm:$0xff] %v1860
      %1893 = vst [vmem:[%s246 + $0xb0] sm:$0xff] %v1861
      %1894 = vst [vmem:[%s246 + $0xb8] sm:$0xff] %v1862
      %1895 = vst [vmem:[%s246 + $0xc0] sm:$0xff] %v1863
      %1896 = vst [vmem:[%s246 + $0xc8] sm:$0xff] %v1864
      %1897 = vst [vmem:[%s246 + $0xd0] sm:$0xff] %v1865
      %1898 = vst [vmem:[%s246 + $0xd8] sm:$0xff] %v1866
      %1899 = vst [vmem:[%s246 + $0xe0] sm:$0xff] %v1867
      %1900 = vst [vmem:[%s246 + $0xe8] sm:$0xff] %v1868
      %1901 = vst [vmem:[%s246 + $0xf0] sm:$0xff] %v1869
      %1902 = vst [vmem:[%s246 + $0xf8] sm:$0xff] %v1870
      %s1903 = smul.u32 32, %s21
      %p1904 = scmp.lt.s32.totalorder %s20, 1
      %s1905 = scalar_select %p1904, %s20, 1
      %p1906 = scmp.lt.s32.totalorder %s1903, 31
      %s1907 = scalar_select %p1906, %s1903, 31
      %s1908 = smul.addr %s1905, 32
      %s1909 = sadd.s32 %s1907, %s1908
      %s1910 = smul.addr %s1909, 8
      %s1911 = scalar_lea.vmem %s5, %s1910
      // Predicated region
      $region45: #{nl_block_nd_forward.1} parent=39 // pred_check
        %p1912 = pneg %p158
      $region46: #{nl_block_nd_forward.1} parent=39 // pred_check_branch
        %1914 = sbr.rel (%p1912) target = $region48
      $region47: #{nl_block_nd_forward.1} parent=39 // pred_region
        %s1915 = smul.u32 32, %s21
      $region48: #{nl_block_nd_forward.1} parent=39 // pred_fallthru
        _
    $region40: #{nl_block_nd_forward.1} parent=5 // pred_fallthru
      _
    %p1916 = scmp.le.s32.totalorder 2, %s11
    // Predicated region
    $region49: #{nl_block_nd_forward.1} parent=5 // pred_check
      %p1917 = pneg %p1916
    $region50: #{nl_block_nd_forward.1} parent=5 // pred_check_branch
      %1919 = sbr.rel (%p1917) target = $region52
    $region51: #{nl_block_nd_forward.1} parent=5 // pred_region
      %s1920 = ssub.s32 %s11, 2
      // Predicated region
      $region53: #{nl_block_nd_forward.1} parent=51 // pred_check
        %p1921 = pneg %p164
      $region54: #{nl_block_nd_forward.1} parent=51 // pred_check_branch
        %1923 = sbr.rel (%p1921) target = $region56
      $region55: #{nl_block_nd_forward.1} parent=51 // pred_region
        %s1924 = smul.u32 32, %s23
        %p1925 = scmp.lt.s32.totalorder %s22, 1
        %s1926 = scalar_select %p1925, %s22, 1
        %p1927 = scmp.lt.s32.totalorder %s1924, 31
        %s1928 = scalar_select %p1927, %s1924, 31
        %s1929 = smul.addr %s1926, 32
        %s1930 = sadd.s32 %s1928, %s1929
        %s1931 = smul.addr %s1930, 8
        %s1932 = scalar_lea.vmem %s5, %s1931
      $region56: #{nl_block_nd_forward.1} parent=51 // pred_fallthru
        _
    $region52: #{nl_block_nd_forward.1} parent=5 // pred_fallthru
      _
  $region6: #{nl_block_nd_forward.1} parent=0 // loop_footer
    %s15 = sadd.s32 1, %s11
  $region7: #{nl_block_nd_forward.1} parent=0 // loop_footer_branch
    %10 = sbr.rel target = $region3
  $region8: #{nl_block_nd_forward.1} parent=0 // loop_exit
    _

</llo_original>
